<compile_context>
chip_gen: v7x
topology: tpu7x:2x2x1
jax: 0.10.0
libtpu: 0.0.40
codegen_flags: <defaults>
</compile_context>

<pallas_src>
import functools
import numpy as np
import jax
import jax.numpy as jnp
from jax.experimental import pallas as pl
from jax.experimental.pallas import tpu as pltpu

# ----------------------- small, module-consistent hyperparameters -------------
IMG_SIZE = 32          # input_shape=[32, 32]
PATCH = 16             # patch_size
IN_CHANS = 3
EMBED_DIM = 32         # num_features
DEPTH = 2
NUM_HEADS = 4
MLP_RATIO = 4.0
NUM_CLASSES = 10
LN_EPS = 1e-6
OLD_GRID = 224 // PATCH          # pos_embed grid is hard-coded to 224 in the module
NEW_GRID = IMG_SIZE // PATCH
NUM_TOKENS = NEW_GRID * NEW_GRID + 1
HEAD_DIM = EMBED_DIM // NUM_HEADS
HIDDEN = int(EMBED_DIM * MLP_RATIO)   # 128 (== HEAD_PAD, so fc1_b/head_b share a slab)
HEAD_PAD = 128                   # lane-dense padded class dim

GELU_C = float(np.sqrt(2.0 / np.pi))


# ----------------------------- in-kernel helpers ------------------------------
def _layernorm(v, w, b, eps):
    mu = jnp.mean(v, axis=-1, keepdims=True)
    d = v - mu
    var = jnp.mean(d * d, axis=-1, keepdims=True)
    return d * jax.lax.rsqrt(var + eps) * w + b


def _gelu_tanh(v):
    # matches the module's GELU: 0.5*x*(1+tanh(sqrt(2/pi)*(x+0.044715*x^3)))
    return 0.5 * v * (1.0 + jnp.tanh(GELU_C * (v + 0.044715 * v * v * v)))


# ------------------------------ fused ViT kernel -------------------------------
def _vit_fused_kernel(patches_ref, patch_w_ref, vec32_ref, vec128_ref,
                      wqkv_ref, bqkv_ref, mask_ref, projw_ref, fc1w_ref,
                      fc2w_ref, headw_ref, o_ref, *, depth, num_heads, eps):
    N = patches_ref.shape[1]
    D = patch_w_ref.shape[1]
    hd = D // num_heads
    scale = float(hd) ** -0.5

    # vec32 row layout: [0:N] embed_add | per layer: ln1_w, ln1_b, proj_b,
    # ln2_w, ln2_b, fc2_b | norm_w, norm_b
    def vrow(r, n=1):
        return vec32_ref[pl.ds(r, n), :]

    # ---- patch embedding; row 0 of patches is zero so the cls token comes
    # entirely from embed_add (cls_token + pos[0]); patch rows of embed_add
    # already contain (patch_bias + pos[1:]).
    x = jnp.dot(patches_ref[0], patch_w_ref[...],
                preferred_element_type=jnp.float32) + vrow(0, N)

    neg = mask_ref[...]            # (H*N, H*N): 0 on same-head blocks, -1e30 off

    for l in range(depth):
        base = N + 6 * l
        # -------------------- attention branch --------------------
        h = _layernorm(x, vrow(base), vrow(base + 1), eps)
        # one fused QKV matmul; columns are (head, q|k|v, within)
        qkv = jnp.dot(h, wqkv_ref[l],
                      preferred_element_type=jnp.float32) + bqkv_ref[l]      # (N, 3D)
        # stack heads along sublanes -> (H*N, 3*hd)
        stk = jnp.concatenate(
            [qkv[:, g * 3 * hd:(g + 1) * 3 * hd] for g in range(num_heads)],
            axis=0)
        q = stk[:, 0:hd]
        k = stk[:, hd:2 * hd]
        v = stk[:, 2 * hd:3 * hd]
        # one block-diagonal score matmul over all heads
        s = jax.lax.dot_general(q, k, (((1,), (1,)), ((), ())),
                                preferred_element_type=jnp.float32) * scale + neg
        s = s - jnp.max(s, axis=-1, keepdims=True)
        p = jnp.exp(s)
        p = p * pl.reciprocal(jnp.sum(p, axis=-1, keepdims=True), approx=True)
        ctx = jnp.dot(p, v, preferred_element_type=jnp.float32)             # (H*N, hd)
        # un-stack heads back to (N, D) along lanes (stays in vregs; no scratch)
        ctx = jnp.concatenate(
            [ctx[g * N:(g + 1) * N, :] for g in range(num_heads)], axis=1)
        x = x + jnp.dot(ctx, projw_ref[l],
                        preferred_element_type=jnp.float32) + vrow(base + 2)

        # ----------------------- MLP branch ------------------------
        hm = _layernorm(x, vrow(base + 3), vrow(base + 4), eps)
        hm = jnp.dot(hm, fc1w_ref[l],
                     preferred_element_type=jnp.float32) + vec128_ref[pl.ds(l, 1), :]
        hm = _gelu_tanh(hm)
        x = x + jnp.dot(hm, fc2w_ref[l],
                        preferred_element_type=jnp.float32) + vrow(base + 5)

    # -------------------- final norm + head (lane-padded) --------------------
    nrow = N + 6 * depth
    cls = _layernorm(x[0:1, :], vrow(nrow), vrow(nrow + 1), eps)
    o_ref[0] = jnp.dot(cls, headw_ref[...],
                       preferred_element_type=jnp.float32) + vec128_ref[pl.ds(depth, 1), :]


_WEIGHT_ORDER = ['patch_w', 'vec32', 'vec128', 'wqkv', 'bqkv', 'attn_mask',
                 'proj_w', 'fc1_w', 'fc2_w', 'head_w']


def vit_forward(x, packed):
    """Full ViT forward: im2col in the wrapper, everything else in one kernel."""
    B, C, H, W = x.shape
    nH, nW = H // PATCH, W // PATCH
    K = C * PATCH * PATCH
    N = nH * nW + 1

    # im2col patch extraction (layout plumbing); patch vector ordered (C, kh, kw)
    # to match Conv2d, plus a zero row for the cls-token slot.
    patches = x.reshape(B, C, nH, PATCH, nW, PATCH)
    patches = patches.transpose(0, 2, 4, 1, 3, 5).reshape(B, nH * nW, K)
    patches = jnp.concatenate([jnp.zeros((B, 1, K), jnp.float32), patches], axis=1)

    weights = [packed[k] for k in _WEIGHT_ORDER]

    def fixed(a):
        nd = a.ndim
        return pl.BlockSpec(a.shape, lambda b, _nd=nd: (0,) * _nd)

    kern = functools.partial(_vit_fused_kernel, depth=DEPTH,
                             num_heads=NUM_HEADS, eps=LN_EPS)

    out = pl.pallas_call(
        kern,
        grid=(B,),
        out_shape=jax.ShapeDtypeStruct((B, 1, HEAD_PAD), jnp.float32),
        in_specs=[pl.BlockSpec((1, N, K), lambda b: (b, 0, 0))] +
                 [fixed(a) for a in weights],
        out_specs=pl.BlockSpec((1, 1, HEAD_PAD), lambda b: (b, 0, 0)),
        compiler_params=pltpu.CompilerParams(
            dimension_semantics=("parallel",)),
    )(patches, *weights)
    return out[:, 0, :NUM_CLASSES]


# ------------------- pos-embed bicubic resize (parameter glue) ----------------
def bicubic_weight_matrix(in_size, out_size, A=-0.75):
    """PyTorch-style bicubic (align_corners=False, a=-0.75) as a (out,in) matrix."""
    W = np.zeros((out_size, in_size), dtype=np.float64)
    scale = in_size / out_size
    def cc1(t):  # |x| <= 1
        return ((A + 2.0) * t - (A + 3.0)) * t * t + 1.0
    def cc2(t):  # 1 < |x| < 2
        return ((A * t - 5.0 * A) * t + 8.0 * A) * t - 4.0 * A
    for i in range(out_size):
        src = (i + 0.5) * scale - 0.5
        x0 = int(np.floor(src))
        t = src - x0
        coeffs = [cc2(t + 1.0), cc1(t), cc1(1.0 - t), cc2(2.0 - t)]
        for k, c in enumerate(coeffs):
            idx = min(max(x0 - 1 + k, 0), in_size - 1)
            W[i, idx] += c
    return W.astype(np.float32)


def build_pos_embed(pos_embed, old_hw, new_hw):
    d = pos_embed.shape[-1]
    cls_pe = pos_embed[:, :1, :]
    img_pe = pos_embed[0, 1:, :].reshape(old_hw[0], old_hw[1], d)
    Wh = jnp.asarray(bicubic_weight_matrix(old_hw[0], new_hw[0]))
    Ww = jnp.asarray(bicubic_weight_matrix(old_hw[1], new_hw[1]))
    res = jnp.einsum('oi,ijd->ojd', Wh, img_pe)
    res = jnp.einsum('pj,ojd->opd', Ww, res)
    res = res.reshape(1, new_hw[0] * new_hw[1], d)
    return jnp.concatenate([cls_pe, res], axis=1)


# --------------------------- parameters & packing ------------------------------
def init_params(key):
    keys = jax.random.split(key, 10 + DEPTH)

    def nrm(k, shape, scale=0.02):
        return scale * jax.random.normal(k, shape, dtype=jnp.float32)

    params = {
        'patch_w': nrm(keys[0], (IN_CHANS * PATCH * PATCH, EMBED_DIM)),
        'patch_b': nrm(keys[1], (EMBED_DIM,)),
        'cls_token': nrm(keys[2], (1, 1, EMBED_DIM)),
        'pos_embed': nrm(keys[3], (1, OLD_GRID * OLD_GRID + 1, EMBED_DIM)),
        'norm_w': jnp.ones((EMBED_DIM,), jnp.float32),
        'norm_b': jnp.zeros((EMBED_DIM,), jnp.float32),
        'head_w': nrm(keys[4], (EMBED_DIM, NUM_CLASSES)),
        'head_b': nrm(keys[5], (NUM_CLASSES,)),
        'blocks': [],
    }
    for i in range(DEPTH):
        bk = jax.random.split(keys[6 + i], 9)
        params['blocks'].append({
            'ln1_w': jnp.ones((EMBED_DIM,), jnp.float32),
            'ln1_b': jnp.zeros((EMBED_DIM,), jnp.float32),
            'qkv_w': nrm(bk[0], (EMBED_DIM, 3 * EMBED_DIM)),
            'qkv_b': nrm(bk[1], (3 * EMBED_DIM,)),          # qkv_bias=True
            'proj_w': nrm(bk[2], (EMBED_DIM, EMBED_DIM)),
            'proj_b': nrm(bk[3], (EMBED_DIM,)),
            'ln2_w': jnp.ones((EMBED_DIM,), jnp.float32),
            'ln2_b': jnp.zeros((EMBED_DIM,), jnp.float32),
            'fc1_w': nrm(bk[4], (EMBED_DIM, HIDDEN)),
            'fc1_b': nrm(bk[5], (HIDDEN,)),
            'fc2_w': nrm(bk[6], (HIDDEN, EMBED_DIM)),
            'fc2_b': nrm(bk[7], (EMBED_DIM,)),
        })
    return params


def prepare_params(params):
    """One-time packing of the module parameters into kernel-friendly arrays."""
    D, H, L, hd, N = EMBED_DIM, NUM_HEADS, DEPTH, HEAD_DIM, NUM_TOKENS

    pos = params['pos_embed_resized'][0]                       # (N, D)
    embed_add = jnp.concatenate(
        [params['cls_token'][0] + pos[:1],                     # cls row
         pos[1:] + params['patch_b'][None, :]], axis=0)        # patch rows

    # one (R, 32) slab for every 32-wide vector, indexed statically in-kernel
    rows = [embed_add]
    for blk in params['blocks']:
        rows.append(jnp.stack([blk['ln1_w'], blk['ln1_b'], blk['proj_b'],
                               blk['ln2_w'], blk['ln2_b'], blk['fc2_b']], axis=0))
    rows.append(jnp.stack([params['norm_w'], params['norm_b']], axis=0))
    vec32 = jnp.concatenate(rows, axis=0)                      # (N + 6L + 2, D)

    # one (L+1, 128) slab for the 128-wide biases (HIDDEN == HEAD_PAD == 128)
    head_b_pad = jnp.zeros((1, HEAD_PAD), jnp.float32).at[0, :NUM_CLASSES].set(
        params['head_b'])
    vec128 = jnp.concatenate(
        [jnp.stack([blk['fc1_b'] for blk in params['blocks']], axis=0),
         head_b_pad], axis=0)

    def stack(name):
        return jnp.stack([blk[name] for blk in params['blocks']], axis=0)

    # fused QKV weight with columns reordered from (q|k|v, head, within) to
    # (head, q|k|v, within) so the kernel can lane-slice one contiguous block
    # per head before stacking heads along sublanes.
    wqkv = stack('qkv_w').reshape(L, D, 3, H, hd).transpose(0, 1, 3, 2, 4)
    wqkv = wqkv.reshape(L, D, 3 * D)
    bqkv = stack('qkv_b').reshape(L, 3, H, hd).transpose(0, 2, 1, 3).reshape(L, 1, 3 * D)

    head_w_pad = jnp.zeros((D, HEAD_PAD), jnp.float32).at[:, :NUM_CLASSES].set(
        params['head_w'])

    # additive block-diagonal mask for the batched-heads (H*N, H*N) score matrix
    gid = np.arange(H * N) // N
    attn_mask = jnp.asarray(
        np.where(gid[:, None] == gid[None, :], 0.0, -1e30).astype(np.float32))

    return {
        'patch_w': params['patch_w'],
        'vec32': vec32,
        'vec128': vec128,
        'wqkv': wqkv,
        'bqkv': bqkv,
        'attn_mask': attn_mask,
        'proj_w': stack('proj_w'),
        'fc1_w': stack('fc1_w'),
        'fc2_w': stack('fc2_w'),
        'head_w': head_w_pad,
    }


# --------------------------- pure-JAX reference --------------------------------
def reference_forward(x, params):
    B, C, H, W = x.shape
    nH, nW = H // PATCH, W // PATCH
    patches = x.reshape(B, C, nH, PATCH, nW, PATCH)
    patches = patches.transpose(0, 2, 4, 1, 3, 5).reshape(B, nH * nW, C * PATCH * PATCH)
    tok = patches @ params['patch_w'] + params['patch_b']
    cls = jnp.broadcast_to(params['cls_token'], (B, 1, EMBED_DIM))
    xt = jnp.concatenate([cls, tok], axis=1) + params['pos_embed_resized']

    def ln(v, w, b):
        mu = v.mean(-1, keepdims=True)
        var = ((v - mu) ** 2).mean(-1, keepdims=True)
        return (v - mu) / jnp.sqrt(var + LN_EPS) * w + b

    hd = EMBED_DIM // NUM_HEADS
    for p in params['blocks']:
        h = ln(xt, p['ln1_w'], p['ln1_b'])
        qkv = h @ p['qkv_w'] + p['qkv_b']
        qkv = qkv.reshape(B, -1, 3, NUM_HEADS, hd).transpose(2, 0, 3, 1, 4)
        q, k, v = qkv[0], qkv[1], qkv[2]
        attn = jnp.einsum('bhnd,bhmd->bhnm', q, k) * (hd ** -0.5)
        attn = jax.nn.softmax(attn, axis=-1)
        o = jnp.einsum('bhnm,bhmd->bhnd', attn, v).transpose(0, 2, 1, 3)
        o = o.reshape(B, -1, EMBED_DIM)
        xt = xt + (o @ p['proj_w'] + p['proj_b'])
        h = ln(xt, p['ln2_w'], p['ln2_b'])
        h = h @ p['fc1_w'] + p['fc1_b']
        h = 0.5 * h * (1.0 + jnp.tanh(GELU_C * (h + 0.044715 * h ** 3)))
        xt = xt + (h @ p['fc2_w'] + p['fc2_b'])
    cls_out = ln(xt, params['norm_w'], params['norm_b'])[:, 0]
    return cls_out @ params['head_w'] + params['head_b']


# ------------------------------------ main -------------------------------------
if __name__ == "__main__":
    key = jax.random.PRNGKey(0)
    pkey, xkey = jax.random.split(key)

    params = init_params(pkey)
    params['pos_embed_resized'] = build_pos_embed(
        params['pos_embed'], (OLD_GRID, OLD_GRID), (NEW_GRID, NEW_GRID))
    packed = prepare_params(params)          # one-time parameter packing

    x = jax.random.normal(xkey, (2, IN_CHANS, IMG_SIZE, IMG_SIZE), dtype=jnp.float32)

    out = jax.jit(vit_forward)(x, packed)
    out = jax.block_until_ready(out)

    ref = reference_forward(x, params)
    np.testing.assert_allclose(np.asarray(out), np.asarray(ref), rtol=1e-3, atol=1e-3)

    print("KERNEL_OK")
</pallas_src>

<mosaic_0001>
module attributes {stable_mosaic.version = 11 : i64} {
  func.func @_vit_fused_kernel(%arg0: i32, %arg1: memref<1x5x768xf32, #tpu.memory_space<vmem>>, %arg2: memref<768x32xf32, #tpu.memory_space<vmem>>, %arg3: memref<19x32xf32, #tpu.memory_space<vmem>>, %arg4: memref<3x128xf32, #tpu.memory_space<vmem>>, %arg5: memref<2x32x96xf32, #tpu.memory_space<vmem>>, %arg6: memref<2x1x96xf32, #tpu.memory_space<vmem>>, %arg7: memref<20x20xf32, #tpu.memory_space<vmem>>, %arg8: memref<2x32x32xf32, #tpu.memory_space<vmem>>, %arg9: memref<2x32x128xf32, #tpu.memory_space<vmem>>, %arg10: memref<2x128x32xf32, #tpu.memory_space<vmem>>, %arg11: memref<32x128xf32, #tpu.memory_space<vmem>>, %arg12: memref<1x1x128xf32, #tpu.memory_space<vmem>>) attributes {dimension_semantics = [#tpu.dimension_semantics<parallel>], iteration_bounds = array<i64: 2>, scalar_prefetch = 0 : i64, scratch_operands = 0 : i64, tpu.core_type = #tpu.core_type<tc>, window_params = [{transform_indices = @transform_0, window_bounds = array<i64: 1, 5, 768>}, {pipeline_mode = #tpu.pipeline_mode<synchronous>, transform_indices = @transform_1, window_bounds = array<i64: 768, 32>}, {pipeline_mode = #tpu.pipeline_mode<synchronous>, transform_indices = @transform_2, window_bounds = array<i64: 19, 32>}, {pipeline_mode = #tpu.pipeline_mode<synchronous>, transform_indices = @transform_3, window_bounds = array<i64: 3, 128>}, {pipeline_mode = #tpu.pipeline_mode<synchronous>, transform_indices = @transform_4, window_bounds = array<i64: 2, 32, 96>}, {pipeline_mode = #tpu.pipeline_mode<synchronous>, transform_indices = @transform_5, window_bounds = array<i64: 2, 1, 96>}, {pipeline_mode = #tpu.pipeline_mode<synchronous>, transform_indices = @transform_6, window_bounds = array<i64: 20, 20>}, {pipeline_mode = #tpu.pipeline_mode<synchronous>, transform_indices = @transform_7, window_bounds = array<i64: 2, 32, 32>}, {pipeline_mode = #tpu.pipeline_mode<synchronous>, transform_indices = @transform_8, window_bounds = array<i64: 2, 32, 128>}, {pipeline_mode = #tpu.pipeline_mode<synchronous>, transform_indices = @transform_9, window_bounds = array<i64: 2, 128, 32>}, {pipeline_mode = #tpu.pipeline_mode<synchronous>, transform_indices = @transform_10, window_bounds = array<i64: 32, 128>}, {transform_indices = @transform_11, window_bounds = array<i64: 1, 1, 128>}]} {
    %c0 = arith.constant 0 : index
    %c0_0 = arith.constant 0 : index
    %c0_1 = arith.constant 0 : index
    %0 = vector.load %arg1[%c0, %c0_0, %c0_1] : memref<1x5x768xf32, #tpu.memory_space<vmem>>, vector<1x5x768xf32>
    %1 = vector.shape_cast %0 : vector<1x5x768xf32> to vector<5x768xf32>
    %c0_2 = arith.constant 0 : index
    %c0_3 = arith.constant 0 : index
    %2 = vector.load %arg2[%c0_2, %c0_3] : memref<768x32xf32, #tpu.memory_space<vmem>>, vector<768x32xf32>
    %cst = arith.constant dense<0.000000e+00> : vector<5x32xf32>
    %3 = tpu.matmul %1, %2, %cst {dimension_numbers = #tpu.dot_dimension_numbers<[1], [0], [0], [1], [0, 0, 1, 1], [], []>} : vector<5x768xf32>, vector<768x32xf32>, vector<5x32xf32> -> vector<5x32xf32>
    %c0_4 = arith.constant 0 : index
    %c0_5 = arith.constant 0 : index
    %4 = vector.load %arg3[%c0_4, %c0_5] : memref<19x32xf32, #tpu.memory_space<vmem>>, vector<5x32xf32>
    %5 = arith.addf %3, %4 : vector<5x32xf32>
    %c0_6 = arith.constant 0 : index
    %c0_7 = arith.constant 0 : index
    %6 = vector.load %arg7[%c0_6, %c0_7] : memref<20x20xf32, #tpu.memory_space<vmem>>, vector<20x20xf32>
    %c5 = arith.constant 5 : index
    %c0_8 = arith.constant 0 : index
    %7 = vector.load %arg3[%c5, %c0_8] : memref<19x32xf32, #tpu.memory_space<vmem>>, vector<1x32xf32>
    %c6 = arith.constant 6 : index
    %c0_9 = arith.constant 0 : index
    %8 = vector.load %arg3[%c6, %c0_9] : memref<19x32xf32, #tpu.memory_space<vmem>>, vector<1x32xf32>
    %cst_10 = arith.constant dense<0.000000e+00> : vector<5xf32>
    %9 = vector.multi_reduction <add>, %5, %cst_10 [1] : vector<5x32xf32> to vector<5xf32>
    %10 = vector.shape_cast %9 : vector<5xf32> to vector<5x1xf32>
    %cst_11 = arith.constant 3.200000e+01 : f32
    %11 = vector.broadcast %cst_11 : f32 to vector<5x1xf32>
    %12 = arith.divf %10, %11 : vector<5x1xf32>
    %13 = vector.broadcast %12 : vector<5x1xf32> to vector<5x32xf32>
    %14 = arith.subf %5, %13 : vector<5x32xf32>
    %15 = arith.mulf %14, %14 : vector<5x32xf32>
    %cst_12 = arith.constant dense<0.000000e+00> : vector<5xf32>
    %16 = vector.multi_reduction <add>, %15, %cst_12 [1] : vector<5x32xf32> to vector<5xf32>
    %17 = vector.shape_cast %16 : vector<5xf32> to vector<5x1xf32>
    %cst_13 = arith.constant 3.200000e+01 : f32
    %18 = vector.broadcast %cst_13 : f32 to vector<5x1xf32>
    %19 = arith.divf %17, %18 : vector<5x1xf32>
    %cst_14 = arith.constant 9.99999997E-7 : f32
    %20 = vector.broadcast %cst_14 : f32 to vector<5x1xf32>
    %21 = arith.addf %19, %20 : vector<5x1xf32>
    %22 = math.rsqrt %21 : vector<5x1xf32>
    %23 = vector.broadcast %22 : vector<5x1xf32> to vector<5x32xf32>
    %24 = arith.mulf %14, %23 : vector<5x32xf32>
    %25 = vector.broadcast %7 : vector<1x32xf32> to vector<5x32xf32>
    %26 = arith.mulf %24, %25 : vector<5x32xf32>
    %27 = vector.broadcast %8 : vector<1x32xf32> to vector<5x32xf32>
    %28 = arith.addf %26, %27 : vector<5x32xf32>
    %c0_15 = arith.constant 0 : index
    %c0_16 = arith.constant 0 : index
    %c0_17 = arith.constant 0 : index
    %29 = vector.load %arg5[%c0_15, %c0_16, %c0_17] : memref<2x32x96xf32, #tpu.memory_space<vmem>>, vector<1x32x96xf32>
    %30 = vector.shape_cast %29 : vector<1x32x96xf32> to vector<32x96xf32>
    %cst_18 = arith.constant dense<0.000000e+00> : vector<5x96xf32>
    %31 = tpu.matmul %28, %30, %cst_18 {dimension_numbers = #tpu.dot_dimension_numbers<[1], [0], [0], [1], [0, 0, 1, 1], [], []>} : vector<5x32xf32>, vector<32x96xf32>, vector<5x96xf32> -> vector<5x96xf32>
    %c0_19 = arith.constant 0 : index
    %c0_20 = arith.constant 0 : index
    %c0_21 = arith.constant 0 : index
    %32 = vector.load %arg6[%c0_19, %c0_20, %c0_21] : memref<2x1x96xf32, #tpu.memory_space<vmem>>, vector<1x1x96xf32>
    %33 = vector.shape_cast %32 : vector<1x1x96xf32> to vector<1x96xf32>
    %34 = vector.broadcast %33 : vector<1x96xf32> to vector<5x96xf32>
    %35 = arith.addf %31, %34 : vector<5x96xf32>
    %36 = vector.extract_strided_slice %35 {offsets = [0, 0], sizes = [5, 24], strides = [1, 1]} : vector<5x96xf32> to vector<5x24xf32>
    %37 = vector.extract_strided_slice %35 {offsets = [0, 24], sizes = [5, 24], strides = [1, 1]} : vector<5x96xf32> to vector<5x24xf32>
    %38 = vector.extract_strided_slice %35 {offsets = [0, 48], sizes = [5, 24], strides = [1, 1]} : vector<5x96xf32> to vector<5x24xf32>
    %39 = vector.extract_strided_slice %35 {offsets = [0, 72], sizes = [5, 24], strides = [1, 1]} : vector<5x96xf32> to vector<5x24xf32>
    %40 = tpu.concatenate %36, %37, %38, %39 in 0 : vector<5x24xf32>, vector<5x24xf32>, vector<5x24xf32>, vector<5x24xf32> -> vector<20x24xf32>
    %41 = vector.extract_strided_slice %40 {offsets = [0, 0], sizes = [20, 8], strides = [1, 1]} : vector<20x24xf32> to vector<20x8xf32>
    %42 = vector.extract_strided_slice %40 {offsets = [0, 8], sizes = [20, 8], strides = [1, 1]} : vector<20x24xf32> to vector<20x8xf32>
    %43 = vector.extract_strided_slice %40 {offsets = [0, 16], sizes = [20, 8], strides = [1, 1]} : vector<20x24xf32> to vector<20x8xf32>
    %cst_22 = arith.constant dense<0.000000e+00> : vector<20x20xf32>
    %44 = tpu.matmul %41, %42, %cst_22 {dimension_numbers = #tpu.dot_dimension_numbers<[1], [1], [0], [0], [0, 0, 1, 0], [], []>} : vector<20x8xf32>, vector<20x8xf32>, vector<20x20xf32> -> vector<20x20xf32>
    %cst_23 = arith.constant 0.353553385 : f32
    %45 = vector.broadcast %cst_23 : f32 to vector<20x20xf32>
    %46 = arith.mulf %44, %45 : vector<20x20xf32>
    %47 = arith.addf %46, %6 : vector<20x20xf32>
    %cst_24 = arith.constant dense<0xFF800000> : vector<20xf32>
    %48 = vector.multi_reduction <maximumf>, %47, %cst_24 [1] : vector<20x20xf32> to vector<20xf32>
    %49 = vector.shape_cast %48 : vector<20xf32> to vector<20x1xf32>
    %50 = vector.broadcast %49 : vector<20x1xf32> to vector<20x20xf32>
    %51 = arith.subf %47, %50 : vector<20x20xf32>
    %52 = math.exp %51 : vector<20x20xf32>
    %cst_25 = arith.constant dense<0.000000e+00> : vector<20xf32>
    %53 = vector.multi_reduction <add>, %52, %cst_25 [1] : vector<20x20xf32> to vector<20xf32>
    %54 = vector.shape_cast %53 : vector<20xf32> to vector<20x1xf32>
    %55 = tpu.reciprocal %54 {approx = true} : vector<20x1xf32> -> vector<20x1xf32>
    %56 = vector.broadcast %55 : vector<20x1xf32> to vector<20x20xf32>
    %57 = arith.mulf %52, %56 : vector<20x20xf32>
    %cst_26 = arith.constant dense<0.000000e+00> : vector<20x8xf32>
    %58 = tpu.matmul %57, %43, %cst_26 {dimension_numbers = #tpu.dot_dimension_numbers<[1], [0], [0], [1], [0, 0, 1, 1], [], []>} : vector<20x20xf32>, vector<20x8xf32>, vector<20x8xf32> -> vector<20x8xf32>
    %59 = vector.extract_strided_slice %58 {offsets = [0, 0], sizes = [5, 8], strides = [1, 1]} : vector<20x8xf32> to vector<5x8xf32>
    %60 = vector.extract_strided_slice %58 {offsets = [5, 0], sizes = [5, 8], strides = [1, 1]} : vector<20x8xf32> to vector<5x8xf32>
    %61 = vector.extract_strided_slice %58 {offsets = [10, 0], sizes = [5, 8], strides = [1, 1]} : vector<20x8xf32> to vector<5x8xf32>
    %62 = vector.extract_strided_slice %58 {offsets = [15, 0], sizes = [5, 8], strides = [1, 1]} : vector<20x8xf32> to vector<5x8xf32>
    %63 = tpu.concatenate %59, %60, %61, %62 in 1 : vector<5x8xf32>, vector<5x8xf32>, vector<5x8xf32>, vector<5x8xf32> -> vector<5x32xf32>
    %c0_27 = arith.constant 0 : index
    %c0_28 = arith.constant 0 : index
    %c0_29 = arith.constant 0 : index
    %64 = vector.load %arg8[%c0_27, %c0_28, %c0_29] : memref<2x32x32xf32, #tpu.memory_space<vmem>>, vector<1x32x32xf32>
    %65 = vector.shape_cast %64 : vector<1x32x32xf32> to vector<32x32xf32>
    %cst_30 = arith.constant dense<0.000000e+00> : vector<5x32xf32>
    %66 = tpu.matmul %63, %65, %cst_30 {dimension_numbers = #tpu.dot_dimension_numbers<[1], [0], [0], [1], [0, 0, 1, 1], [], []>} : vector<5x32xf32>, vector<32x32xf32>, vector<5x32xf32> -> vector<5x32xf32>
    %67 = arith.addf %5, %66 : vector<5x32xf32>
    %c7 = arith.constant 7 : index
    %c0_31 = arith.constant 0 : index
    %68 = vector.load %arg3[%c7, %c0_31] : memref<19x32xf32, #tpu.memory_space<vmem>>, vector<1x32xf32>
    %69 = vector.broadcast %68 : vector<1x32xf32> to vector<5x32xf32>
    %70 = arith.addf %67, %69 : vector<5x32xf32>
    %c8 = arith.constant 8 : index
    %c0_32 = arith.constant 0 : index
    %71 = vector.load %arg3[%c8, %c0_32] : memref<19x32xf32, #tpu.memory_space<vmem>>, vector<1x32xf32>
    %c9 = arith.constant 9 : index
    %c0_33 = arith.constant 0 : index
    %72 = vector.load %arg3[%c9, %c0_33] : memref<19x32xf32, #tpu.memory_space<vmem>>, vector<1x32xf32>
    %cst_34 = arith.constant dense<0.000000e+00> : vector<5xf32>
    %73 = vector.multi_reduction <add>, %70, %cst_34 [1] : vector<5x32xf32> to vector<5xf32>
    %74 = vector.shape_cast %73 : vector<5xf32> to vector<5x1xf32>
    %cst_35 = arith.constant 3.200000e+01 : f32
    %75 = vector.broadcast %cst_35 : f32 to vector<5x1xf32>
    %76 = arith.divf %74, %75 : vector<5x1xf32>
    %77 = vector.broadcast %76 : vector<5x1xf32> to vector<5x32xf32>
    %78 = arith.subf %70, %77 : vector<5x32xf32>
    %79 = arith.mulf %78, %78 : vector<5x32xf32>
    %cst_36 = arith.constant dense<0.000000e+00> : vector<5xf32>
    %80 = vector.multi_reduction <add>, %79, %cst_36 [1] : vector<5x32xf32> to vector<5xf32>
    %81 = vector.shape_cast %80 : vector<5xf32> to vector<5x1xf32>
    %cst_37 = arith.constant 3.200000e+01 : f32
    %82 = vector.broadcast %cst_37 : f32 to vector<5x1xf32>
    %83 = arith.divf %81, %82 : vector<5x1xf32>
    %cst_38 = arith.constant 9.99999997E-7 : f32
    %84 = vector.broadcast %cst_38 : f32 to vector<5x1xf32>
    %85 = arith.addf %83, %84 : vector<5x1xf32>
    %86 = math.rsqrt %85 : vector<5x1xf32>
    %87 = vector.broadcast %86 : vector<5x1xf32> to vector<5x32xf32>
    %88 = arith.mulf %78, %87 : vector<5x32xf32>
    %89 = vector.broadcast %71 : vector<1x32xf32> to vector<5x32xf32>
    %90 = arith.mulf %88, %89 : vector<5x32xf32>
    %91 = vector.broadcast %72 : vector<1x32xf32> to vector<5x32xf32>
    %92 = arith.addf %90, %91 : vector<5x32xf32>
    %c0_39 = arith.constant 0 : index
    %c0_40 = arith.constant 0 : index
    %c0_41 = arith.constant 0 : index
    %93 = vector.load %arg9[%c0_39, %c0_40, %c0_41] : memref<2x32x128xf32, #tpu.memory_space<vmem>>, vector<1x32x128xf32>
    %94 = vector.shape_cast %93 : vector<1x32x128xf32> to vector<32x128xf32>
    %cst_42 = arith.constant dense<0.000000e+00> : vector<5x128xf32>
    %95 = tpu.matmul %92, %94, %cst_42 {dimension_numbers = #tpu.dot_dimension_numbers<[1], [0], [0], [1], [0, 0, 1, 1], [], []>} : vector<5x32xf32>, vector<32x128xf32>, vector<5x128xf32> -> vector<5x128xf32>
    %c0_43 = arith.constant 0 : index
    %c0_44 = arith.constant 0 : index
    %96 = vector.load %arg4[%c0_43, %c0_44] : memref<3x128xf32, #tpu.memory_space<vmem>>, vector<1x128xf32>
    %97 = vector.broadcast %96 : vector<1x128xf32> to vector<5x128xf32>
    %98 = arith.addf %95, %97 : vector<5x128xf32>
    %cst_45 = arith.constant 5.000000e-01 : f32
    %99 = vector.broadcast %cst_45 : f32 to vector<5x128xf32>
    %100 = arith.mulf %99, %98 : vector<5x128xf32>
    %cst_46 = arith.constant 4.471500e-02 : f32
    %101 = vector.broadcast %cst_46 : f32 to vector<5x128xf32>
    %102 = arith.mulf %101, %98 : vector<5x128xf32>
    %103 = arith.mulf %102, %98 : vector<5x128xf32>
    %104 = arith.mulf %103, %98 : vector<5x128xf32>
    %105 = arith.addf %98, %104 : vector<5x128xf32>
    %cst_47 = arith.constant 0.797884583 : f32
    %106 = vector.broadcast %cst_47 : f32 to vector<5x128xf32>
    %107 = arith.mulf %106, %105 : vector<5x128xf32>
    %108 = math.tanh %107 : vector<5x128xf32>
    %cst_48 = arith.constant 1.000000e+00 : f32
    %109 = vector.broadcast %cst_48 : f32 to vector<5x128xf32>
    %110 = arith.addf %109, %108 : vector<5x128xf32>
    %111 = arith.mulf %100, %110 : vector<5x128xf32>
    %c0_49 = arith.constant 0 : index
    %c0_50 = arith.constant 0 : index
    %c0_51 = arith.constant 0 : index
    %112 = vector.load %arg10[%c0_49, %c0_50, %c0_51] : memref<2x128x32xf32, #tpu.memory_space<vmem>>, vector<1x128x32xf32>
    %113 = vector.shape_cast %112 : vector<1x128x32xf32> to vector<128x32xf32>
    %cst_52 = arith.constant dense<0.000000e+00> : vector<5x32xf32>
    %114 = tpu.matmul %111, %113, %cst_52 {dimension_numbers = #tpu.dot_dimension_numbers<[1], [0], [0], [1], [0, 0, 1, 1], [], []>} : vector<5x128xf32>, vector<128x32xf32>, vector<5x32xf32> -> vector<5x32xf32>
    %115 = arith.addf %70, %114 : vector<5x32xf32>
    %c10 = arith.constant 10 : index
    %c0_53 = arith.constant 0 : index
    %116 = vector.load %arg3[%c10, %c0_53] : memref<19x32xf32, #tpu.memory_space<vmem>>, vector<1x32xf32>
    %117 = vector.broadcast %116 : vector<1x32xf32> to vector<5x32xf32>
    %118 = arith.addf %115, %117 : vector<5x32xf32>
    %c11 = arith.constant 11 : index
    %c0_54 = arith.constant 0 : index
    %119 = vector.load %arg3[%c11, %c0_54] : memref<19x32xf32, #tpu.memory_space<vmem>>, vector<1x32xf32>
    %c12 = arith.constant 12 : index
    %c0_55 = arith.constant 0 : index
    %120 = vector.load %arg3[%c12, %c0_55] : memref<19x32xf32, #tpu.memory_space<vmem>>, vector<1x32xf32>
    %cst_56 = arith.constant dense<0.000000e+00> : vector<5xf32>
    %121 = vector.multi_reduction <add>, %118, %cst_56 [1] : vector<5x32xf32> to vector<5xf32>
    %122 = vector.shape_cast %121 : vector<5xf32> to vector<5x1xf32>
    %cst_57 = arith.constant 3.200000e+01 : f32
    %123 = vector.broadcast %cst_57 : f32 to vector<5x1xf32>
    %124 = arith.divf %122, %123 : vector<5x1xf32>
    %125 = vector.broadcast %124 : vector<5x1xf32> to vector<5x32xf32>
    %126 = arith.subf %118, %125 : vector<5x32xf32>
    %127 = arith.mulf %126, %126 : vector<5x32xf32>
    %cst_58 = arith.constant dense<0.000000e+00> : vector<5xf32>
    %128 = vector.multi_reduction <add>, %127, %cst_58 [1] : vector<5x32xf32> to vector<5xf32>
    %129 = vector.shape_cast %128 : vector<5xf32> to vector<5x1xf32>
    %cst_59 = arith.constant 3.200000e+01 : f32
    %130 = vector.broadcast %cst_59 : f32 to vector<5x1xf32>
    %131 = arith.divf %129, %130 : vector<5x1xf32>
    %cst_60 = arith.constant 9.99999997E-7 : f32
    %132 = vector.broadcast %cst_60 : f32 to vector<5x1xf32>
    %133 = arith.addf %131, %132 : vector<5x1xf32>
    %134 = math.rsqrt %133 : vector<5x1xf32>
    %135 = vector.broadcast %134 : vector<5x1xf32> to vector<5x32xf32>
    %136 = arith.mulf %126, %135 : vector<5x32xf32>
    %137 = vector.broadcast %119 : vector<1x32xf32> to vector<5x32xf32>
    %138 = arith.mulf %136, %137 : vector<5x32xf32>
    %139 = vector.broadcast %120 : vector<1x32xf32> to vector<5x32xf32>
    %140 = arith.addf %138, %139 : vector<5x32xf32>
    %c1 = arith.constant 1 : index
    %c0_61 = arith.constant 0 : index
    %c0_62 = arith.constant 0 : index
    %141 = vector.load %arg5[%c1, %c0_61, %c0_62] : memref<2x32x96xf32, #tpu.memory_space<vmem>>, vector<1x32x96xf32>
    %142 = vector.shape_cast %141 : vector<1x32x96xf32> to vector<32x96xf32>
    %cst_63 = arith.constant dense<0.000000e+00> : vector<5x96xf32>
    %143 = tpu.matmul %140, %142, %cst_63 {dimension_numbers = #tpu.dot_dimension_numbers<[1], [0], [0], [1], [0, 0, 1, 1], [], []>} : vector<5x32xf32>, vector<32x96xf32>, vector<5x96xf32> -> vector<5x96xf32>
    %c1_64 = arith.constant 1 : index
    %c0_65 = arith.constant 0 : index
    %c0_66 = arith.constant 0 : index
    %144 = vector.load %arg6[%c1_64, %c0_65, %c0_66] : memref<2x1x96xf32, #tpu.memory_space<vmem>>, vector<1x1x96xf32>
    %145 = vector.shape_cast %144 : vector<1x1x96xf32> to vector<1x96xf32>
    %146 = vector.broadcast %145 : vector<1x96xf32> to vector<5x96xf32>
    %147 = arith.addf %143, %146 : vector<5x96xf32>
    %148 = vector.extract_strided_slice %147 {offsets = [0, 0], sizes = [5, 24], strides = [1, 1]} : vector<5x96xf32> to vector<5x24xf32>
    %149 = vector.extract_strided_slice %147 {offsets = [0, 24], sizes = [5, 24], strides = [1, 1]} : vector<5x96xf32> to vector<5x24xf32>
    %150 = vector.extract_strided_slice %147 {offsets = [0, 48], sizes = [5, 24], strides = [1, 1]} : vector<5x96xf32> to vector<5x24xf32>
    %151 = vector.extract_strided_slice %147 {offsets = [0, 72], sizes = [5, 24], strides = [1, 1]} : vector<5x96xf32> to vector<5x24xf32>
    %152 = tpu.concatenate %148, %149, %150, %151 in 0 : vector<5x24xf32>, vector<5x24xf32>, vector<5x24xf32>, vector<5x24xf32> -> vector<20x24xf32>
    %153 = vector.extract_strided_slice %152 {offsets = [0, 0], sizes = [20, 8], strides = [1, 1]} : vector<20x24xf32> to vector<20x8xf32>
    %154 = vector.extract_strided_slice %152 {offsets = [0, 8], sizes = [20, 8], strides = [1, 1]} : vector<20x24xf32> to vector<20x8xf32>
    %155 = vector.extract_strided_slice %152 {offsets = [0, 16], sizes = [20, 8], strides = [1, 1]} : vector<20x24xf32> to vector<20x8xf32>
    %cst_67 = arith.constant dense<0.000000e+00> : vector<20x20xf32>
    %156 = tpu.matmul %153, %154, %cst_67 {dimension_numbers = #tpu.dot_dimension_numbers<[1], [1], [0], [0], [0, 0, 1, 0], [], []>} : vector<20x8xf32>, vector<20x8xf32>, vector<20x20xf32> -> vector<20x20xf32>
    %cst_68 = arith.constant 0.353553385 : f32
    %157 = vector.broadcast %cst_68 : f32 to vector<20x20xf32>
    %158 = arith.mulf %156, %157 : vector<20x20xf32>
    %159 = arith.addf %158, %6 : vector<20x20xf32>
    %cst_69 = arith.constant dense<0xFF800000> : vector<20xf32>
    %160 = vector.multi_reduction <maximumf>, %159, %cst_69 [1] : vector<20x20xf32> to vector<20xf32>
    %161 = vector.shape_cast %160 : vector<20xf32> to vector<20x1xf32>
    %162 = vector.broadcast %161 : vector<20x1xf32> to vector<20x20xf32>
    %163 = arith.subf %159, %162 : vector<20x20xf32>
    %164 = math.exp %163 : vector<20x20xf32>
    %cst_70 = arith.constant dense<0.000000e+00> : vector<20xf32>
    %165 = vector.multi_reduction <add>, %164, %cst_70 [1] : vector<20x20xf32> to vector<20xf32>
    %166 = vector.shape_cast %165 : vector<20xf32> to vector<20x1xf32>
    %167 = tpu.reciprocal %166 {approx = true} : vector<20x1xf32> -> vector<20x1xf32>
    %168 = vector.broadcast %167 : vector<20x1xf32> to vector<20x20xf32>
    %169 = arith.mulf %164, %168 : vector<20x20xf32>
    %cst_71 = arith.constant dense<0.000000e+00> : vector<20x8xf32>
    %170 = tpu.matmul %169, %155, %cst_71 {dimension_numbers = #tpu.dot_dimension_numbers<[1], [0], [0], [1], [0, 0, 1, 1], [], []>} : vector<20x20xf32>, vector<20x8xf32>, vector<20x8xf32> -> vector<20x8xf32>
    %171 = vector.extract_strided_slice %170 {offsets = [0, 0], sizes = [5, 8], strides = [1, 1]} : vector<20x8xf32> to vector<5x8xf32>
    %172 = vector.extract_strided_slice %170 {offsets = [5, 0], sizes = [5, 8], strides = [1, 1]} : vector<20x8xf32> to vector<5x8xf32>
    %173 = vector.extract_strided_slice %170 {offsets = [10, 0], sizes = [5, 8], strides = [1, 1]} : vector<20x8xf32> to vector<5x8xf32>
    %174 = vector.extract_strided_slice %170 {offsets = [15, 0], sizes = [5, 8], strides = [1, 1]} : vector<20x8xf32> to vector<5x8xf32>
    %175 = tpu.concatenate %171, %172, %173, %174 in 1 : vector<5x8xf32>, vector<5x8xf32>, vector<5x8xf32>, vector<5x8xf32> -> vector<5x32xf32>
    %c1_72 = arith.constant 1 : index
    %c0_73 = arith.constant 0 : index
    %c0_74 = arith.constant 0 : index
    %176 = vector.load %arg8[%c1_72, %c0_73, %c0_74] : memref<2x32x32xf32, #tpu.memory_space<vmem>>, vector<1x32x32xf32>
    %177 = vector.shape_cast %176 : vector<1x32x32xf32> to vector<32x32xf32>
    %cst_75 = arith.constant dense<0.000000e+00> : vector<5x32xf32>
    %178 = tpu.matmul %175, %177, %cst_75 {dimension_numbers = #tpu.dot_dimension_numbers<[1], [0], [0], [1], [0, 0, 1, 1], [], []>} : vector<5x32xf32>, vector<32x32xf32>, vector<5x32xf32> -> vector<5x32xf32>
    %179 = arith.addf %118, %178 : vector<5x32xf32>
    %c13 = arith.constant 13 : index
    %c0_76 = arith.constant 0 : index
    %180 = vector.load %arg3[%c13, %c0_76] : memref<19x32xf32, #tpu.memory_space<vmem>>, vector<1x32xf32>
    %181 = vector.broadcast %180 : vector<1x32xf32> to vector<5x32xf32>
    %182 = arith.addf %179, %181 : vector<5x32xf32>
    %c14 = arith.constant 14 : index
    %c0_77 = arith.constant 0 : index
    %183 = vector.load %arg3[%c14, %c0_77] : memref<19x32xf32, #tpu.memory_space<vmem>>, vector<1x32xf32>
    %c15 = arith.constant 15 : index
    %c0_78 = arith.constant 0 : index
    %184 = vector.load %arg3[%c15, %c0_78] : memref<19x32xf32, #tpu.memory_space<vmem>>, vector<1x32xf32>
    %cst_79 = arith.constant dense<0.000000e+00> : vector<5xf32>
    %185 = vector.multi_reduction <add>, %182, %cst_79 [1] : vector<5x32xf32> to vector<5xf32>
    %186 = vector.shape_cast %185 : vector<5xf32> to vector<5x1xf32>
    %cst_80 = arith.constant 3.200000e+01 : f32
    %187 = vector.broadcast %cst_80 : f32 to vector<5x1xf32>
    %188 = arith.divf %186, %187 : vector<5x1xf32>
    %189 = vector.broadcast %188 : vector<5x1xf32> to vector<5x32xf32>
    %190 = arith.subf %182, %189 : vector<5x32xf32>
    %191 = arith.mulf %190, %190 : vector<5x32xf32>
    %cst_81 = arith.constant dense<0.000000e+00> : vector<5xf32>
    %192 = vector.multi_reduction <add>, %191, %cst_81 [1] : vector<5x32xf32> to vector<5xf32>
    %193 = vector.shape_cast %192 : vector<5xf32> to vector<5x1xf32>
    %cst_82 = arith.constant 3.200000e+01 : f32
    %194 = vector.broadcast %cst_82 : f32 to vector<5x1xf32>
    %195 = arith.divf %193, %194 : vector<5x1xf32>
    %cst_83 = arith.constant 9.99999997E-7 : f32
    %196 = vector.broadcast %cst_83 : f32 to vector<5x1xf32>
    %197 = arith.addf %195, %196 : vector<5x1xf32>
    %198 = math.rsqrt %197 : vector<5x1xf32>
    %199 = vector.broadcast %198 : vector<5x1xf32> to vector<5x32xf32>
    %200 = arith.mulf %190, %199 : vector<5x32xf32>
    %201 = vector.broadcast %183 : vector<1x32xf32> to vector<5x32xf32>
    %202 = arith.mulf %200, %201 : vector<5x32xf32>
    %203 = vector.broadcast %184 : vector<1x32xf32> to vector<5x32xf32>
    %204 = arith.addf %202, %203 : vector<5x32xf32>
    %c1_84 = arith.constant 1 : index
    %c0_85 = arith.constant 0 : index
    %c0_86 = arith.constant 0 : index
    %205 = vector.load %arg9[%c1_84, %c0_85, %c0_86] : memref<2x32x128xf32, #tpu.memory_space<vmem>>, vector<1x32x128xf32>
    %206 = vector.shape_cast %205 : vector<1x32x128xf32> to vector<32x128xf32>
    %cst_87 = arith.constant dense<0.000000e+00> : vector<5x128xf32>
    %207 = tpu.matmul %204, %206, %cst_87 {dimension_numbers = #tpu.dot_dimension_numbers<[1], [0], [0], [1], [0, 0, 1, 1], [], []>} : vector<5x32xf32>, vector<32x128xf32>, vector<5x128xf32> -> vector<5x128xf32>
    %c1_88 = arith.constant 1 : index
    %c0_89 = arith.constant 0 : index
    %208 = vector.load %arg4[%c1_88, %c0_89] : memref<3x128xf32, #tpu.memory_space<vmem>>, vector<1x128xf32>
    %209 = vector.broadcast %208 : vector<1x128xf32> to vector<5x128xf32>
    %210 = arith.addf %207, %209 : vector<5x128xf32>
    %cst_90 = arith.constant 5.000000e-01 : f32
    %211 = vector.broadcast %cst_90 : f32 to vector<5x128xf32>
    %212 = arith.mulf %211, %210 : vector<5x128xf32>
    %cst_91 = arith.constant 4.471500e-02 : f32
    %213 = vector.broadcast %cst_91 : f32 to vector<5x128xf32>
    %214 = arith.mulf %213, %210 : vector<5x128xf32>
    %215 = arith.mulf %214, %210 : vector<5x128xf32>
    %216 = arith.mulf %215, %210 : vector<5x128xf32>
    %217 = arith.addf %210, %216 : vector<5x128xf32>
    %cst_92 = arith.constant 0.797884583 : f32
    %218 = vector.broadcast %cst_92 : f32 to vector<5x128xf32>
    %219 = arith.mulf %218, %217 : vector<5x128xf32>
    %220 = math.tanh %219 : vector<5x128xf32>
    %cst_93 = arith.constant 1.000000e+00 : f32
    %221 = vector.broadcast %cst_93 : f32 to vector<5x128xf32>
    %222 = arith.addf %221, %220 : vector<5x128xf32>
    %223 = arith.mulf %212, %222 : vector<5x128xf32>
    %c1_94 = arith.constant 1 : index
    %c0_95 = arith.constant 0 : index
    %c0_96 = arith.constant 0 : index
    %224 = vector.load %arg10[%c1_94, %c0_95, %c0_96] : memref<2x128x32xf32, #tpu.memory_space<vmem>>, vector<1x128x32xf32>
    %225 = vector.shape_cast %224 : vector<1x128x32xf32> to vector<128x32xf32>
    %cst_97 = arith.constant dense<0.000000e+00> : vector<5x32xf32>
    %226 = tpu.matmul %223, %225, %cst_97 {dimension_numbers = #tpu.dot_dimension_numbers<[1], [0], [0], [1], [0, 0, 1, 1], [], []>} : vector<5x128xf32>, vector<128x32xf32>, vector<5x32xf32> -> vector<5x32xf32>
    %227 = arith.addf %182, %226 : vector<5x32xf32>
    %c16 = arith.constant 16 : index
    %c0_98 = arith.constant 0 : index
    %228 = vector.load %arg3[%c16, %c0_98] : memref<19x32xf32, #tpu.memory_space<vmem>>, vector<1x32xf32>
    %229 = vector.broadcast %228 : vector<1x32xf32> to vector<5x32xf32>
    %230 = arith.addf %227, %229 : vector<5x32xf32>
    %231 = vector.extract_strided_slice %230 {offsets = [0, 0], sizes = [1, 32], strides = [1, 1]} : vector<5x32xf32> to vector<1x32xf32>
    %c17 = arith.constant 17 : index
    %c0_99 = arith.constant 0 : index
    %232 = vector.load %arg3[%c17, %c0_99] : memref<19x32xf32, #tpu.memory_space<vmem>>, vector<1x32xf32>
    %c18 = arith.constant 18 : index
    %c0_100 = arith.constant 0 : index
    %233 = vector.load %arg3[%c18, %c0_100] : memref<19x32xf32, #tpu.memory_space<vmem>>, vector<1x32xf32>
    %cst_101 = arith.constant dense<0.000000e+00> : vector<1xf32>
    %234 = vector.multi_reduction <add>, %231, %cst_101 [1] : vector<1x32xf32> to vector<1xf32>
    %235 = vector.shape_cast %234 : vector<1xf32> to vector<1x1xf32>
    %cst_102 = arith.constant 3.200000e+01 : f32
    %236 = vector.broadcast %cst_102 : f32 to vector<1x1xf32>
    %237 = arith.divf %235, %236 : vector<1x1xf32>
    %238 = vector.broadcast %237 : vector<1x1xf32> to vector<1x32xf32>
    %239 = arith.subf %231, %238 : vector<1x32xf32>
    %240 = arith.mulf %239, %239 : vector<1x32xf32>
    %cst_103 = arith.constant dense<0.000000e+00> : vector<1xf32>
    %241 = vector.multi_reduction <add>, %240, %cst_103 [1] : vector<1x32xf32> to vector<1xf32>
    %242 = vector.shape_cast %241 : vector<1xf32> to vector<1x1xf32>
    %cst_104 = arith.constant 3.200000e+01 : f32
    %243 = vector.broadcast %cst_104 : f32 to vector<1x1xf32>
    %244 = arith.divf %242, %243 : vector<1x1xf32>
    %cst_105 = arith.constant 9.99999997E-7 : f32
    %245 = vector.broadcast %cst_105 : f32 to vector<1x1xf32>
    %246 = arith.addf %244, %245 : vector<1x1xf32>
    %247 = math.rsqrt %246 : vector<1x1xf32>
    %248 = vector.broadcast %247 : vector<1x1xf32> to vector<1x32xf32>
    %249 = arith.mulf %239, %248 : vector<1x32xf32>
    %250 = arith.mulf %249, %232 : vector<1x32xf32>
    %251 = arith.addf %250, %233 : vector<1x32xf32>
    %c0_106 = arith.constant 0 : index
    %c0_107 = arith.constant 0 : index
    %252 = vector.load %arg11[%c0_106, %c0_107] : memref<32x128xf32, #tpu.memory_space<vmem>>, vector<32x128xf32>
    %cst_108 = arith.constant dense<0.000000e+00> : vector<1x128xf32>
    %253 = tpu.matmul %251, %252, %cst_108 {dimension_numbers = #tpu.dot_dimension_numbers<[1], [0], [0], [1], [0, 0, 1, 1], [], []>} : vector<1x32xf32>, vector<32x128xf32>, vector<1x128xf32> -> vector<1x128xf32>
    %c2 = arith.constant 2 : index
    %c0_109 = arith.constant 0 : index
    %254 = vector.load %arg4[%c2, %c0_109] : memref<3x128xf32, #tpu.memory_space<vmem>>, vector<1x128xf32>
    %255 = arith.addf %253, %254 : vector<1x128xf32>
    %c0_110 = arith.constant 0 : index
    %c0_111 = arith.constant 0 : index
    %c0_112 = arith.constant 0 : index
    %256 = vector.load %arg12[%c0_110, %c0_111, %c0_112] : memref<1x1x128xf32, #tpu.memory_space<vmem>>, vector<1x1x128xf32>
    %257 = vector.shape_cast %256 : vector<1x1x128xf32> to vector<1x128xf32>
    %258 = vector.shape_cast %255 : vector<1x128xf32> to vector<1x1x128xf32>
    tpu.vector_store %arg12[%c0_110, %c0_111, %c0_112], %258 {strides = array<i32>} : memref<1x1x128xf32, #tpu.memory_space<vmem>>, vector<1x1x128xf32>,
    return
  }
  func.func @transform_0(%arg0: i32) -> (i32, i32, i32) {
    %c0_i32 = arith.constant 0 : i32
    %c0_i32_0 = arith.constant 0 : i32
    %c0_i32_1 = arith.constant 0 : i32
    return %arg0, %c0_i32, %c0_i32_0 : i32, i32, i32
  }
  func.func @transform_1(%arg0: i32) -> (i32, i32) {
    %c0_i32 = arith.constant 0 : i32
    %c0_i32_0 = arith.constant 0 : i32
    %c0_i32_1 = arith.constant 0 : i32
    return %c0_i32, %c0_i32_0 : i32, i32
  }
  func.func @transform_2(%arg0: i32) -> (i32, i32) {
    %c0_i32 = arith.constant 0 : i32
    %c0_i32_0 = arith.constant 0 : i32
    %c0_i32_1 = arith.constant 0 : i32
    return %c0_i32, %c0_i32_0 : i32, i32
  }
  func.func @transform_3(%arg0: i32) -> (i32, i32) {
    %c0_i32 = arith.constant 0 : i32
    %c0_i32_0 = arith.constant 0 : i32
    %c0_i32_1 = arith.constant 0 : i32
    return %c0_i32, %c0_i32_0 : i32, i32
  }
  func.func @transform_4(%arg0: i32) -> (i32, i32, i32) {
    %c0_i32 = arith.constant 0 : i32
    %c0_i32_0 = arith.constant 0 : i32
    %c0_i32_1 = arith.constant 0 : i32
    %c0_i32_2 = arith.constant 0 : i32
    return %c0_i32, %c0_i32_0, %c0_i32_1 : i32, i32, i32
  }
  func.func @transform_5(%arg0: i32) -> (i32, i32, i32) {
    %c0_i32 = arith.constant 0 : i32
    %c0_i32_0 = arith.constant 0 : i32
    %c0_i32_1 = arith.constant 0 : i32
    %c0_i32_2 = arith.constant 0 : i32
    return %c0_i32, %c0_i32_0, %c0_i32_1 : i32, i32, i32
  }
  func.func @transform_6(%arg0: i32) -> (i32, i32) {
    %c0_i32 = arith.constant 0 : i32
    %c0_i32_0 = arith.constant 0 : i32
    %c0_i32_1 = arith.constant 0 : i32
    return %c0_i32, %c0_i32_0 : i32, i32
  }
  func.func @transform_7(%arg0: i32) -> (i32, i32, i32) {
    %c0_i32 = arith.constant 0 : i32
    %c0_i32_0 = arith.constant 0 : i32
    %c0_i32_1 = arith.constant 0 : i32
    %c0_i32_2 = arith.constant 0 : i32
    return %c0_i32, %c0_i32_0, %c0_i32_1 : i32, i32, i32
  }
  func.func @transform_8(%arg0: i32) -> (i32, i32, i32) {
    %c0_i32 = arith.constant 0 : i32
    %c0_i32_0 = arith.constant 0 : i32
    %c0_i32_1 = arith.constant 0 : i32
    %c0_i32_2 = arith.constant 0 : i32
    return %c0_i32, %c0_i32_0, %c0_i32_1 : i32, i32, i32
  }
  func.func @transform_9(%arg0: i32) -> (i32, i32, i32) {
    %c0_i32 = arith.constant 0 : i32
    %c0_i32_0 = arith.constant 0 : i32
    %c0_i32_1 = arith.constant 0 : i32
    %c0_i32_2 = arith.constant 0 : i32
    return %c0_i32, %c0_i32_0, %c0_i32_1 : i32, i32, i32
  }
  func.func @transform_10(%arg0: i32) -> (i32, i32) {
    %c0_i32 = arith.constant 0 : i32
    %c0_i32_0 = arith.constant 0 : i32
    %c0_i32_1 = arith.constant 0 : i32
    return %c0_i32, %c0_i32_0 : i32, i32
  }
  func.func @transform_11(%arg0: i32) -> (i32, i32, i32) {
    %c0_i32 = arith.constant 0 : i32
    %c0_i32_0 = arith.constant 0 : i32
    %c0_i32_1 = arith.constant 0 : i32
    return %arg0, %c0_i32, %c0_i32_0 : i32, i32, i32
  }
}

</mosaic_0001>

<llo_original>
// kernel: vit_forward.1
$region0: #{vit_forward.1}
  #allocation0 [shape = 'u32[]', space=smem, size = 0x4, offset = 0x4, fixed_abs, tag = 'smem constant byte address 0x4 - core index']
  #allocation1 [shape = 'u32[144,128]{1,0:T(1,128)}', space=vmem, size = 0x12000, scoped, tag = 'internal scratch']
  %s0 = inlined_call_operand.vmem [shape: f32[2,5,768], index: 0, kind: input, shape index: {}]
  %s1 = inlined_call_operand.vmem [shape: f32[768,32], index: 1, kind: input, shape index: {}]
  %s2 = inlined_call_operand.vmem [shape: f32[19,32], index: 2, kind: input, shape index: {}]
  %s3 = inlined_call_operand.vmem [shape: f32[3,128], index: 3, kind: input, shape index: {}]
  %s4 = inlined_call_operand.vmem [shape: f32[2,32,96], index: 4, kind: input, shape index: {}]
  %s5 = inlined_call_operand.vmem [shape: f32[2,1,96], index: 5, kind: input, shape index: {}]
  %s6 = inlined_call_operand.vmem [shape: f32[20,20], index: 6, kind: input, shape index: {}]
  %s7 = inlined_call_operand.vmem [shape: f32[2,32,32], index: 7, kind: input, shape index: {}]
  %s8 = inlined_call_operand.vmem [shape: f32[2,32,128], index: 8, kind: input, shape index: {}]
  %s9 = inlined_call_operand.vmem [shape: f32[2,128,32], index: 9, kind: input, shape index: {}]
  %s10 = inlined_call_operand.vmem [shape: f32[32,128], index: 10, kind: input, shape index: {}]
  %s11 = inlined_call_operand.hbm [shape: f32[2,1,128], index: 11, kind: output, shape index: {}]
  %s12 = sld [smem:[#allocation0]]
  $region77: #{vit_forward.1} parent=0
    _
  %s14 = ssub.s32 1, %s12
  %s15 = scalar_select 0, %s14, %s12
  $region1: #{vit_forward.1} parent=0
    #allocation2 [shape = 'u8[1024]{0}', space=vmem, size = 0x400, scoped, tag = 'output window, operand 0']
    #allocation3 [shape = 's32[2]{0}', space=sflag, size = 0x8, scoped, tag = 'scoped memory for vit_forward.1']
    %16 = vsyncpa [#allocation3], 0
    %s17 = scalar_lea.sflag [#allocation3], 1
    %18 = vsyncpa %s17, 0
    loop: start=0, step=1, limit=4
    $region2: #{vit_forward.1} parent=1 // loop_pre_header
      _
    $region3: #{vit_forward.1} parent=1 // loop_header
      %s20 = sphi 0, %s24
      %p21 = scmp.ge.s32.totalorder %s20, 4
      %s30 = sphi 0, %s32
      %s33 = sphi 0, %s30
      %s34 = sphi 0, %s33
      %s50 = sphi 0, %s34
      %s54 = sphi 0, %s54
      %s56 = sphi 0, %s54
      %s57 = sphi 0, %s56
      %s71 = sphi 0, %s57
      %s75 = sphi 0, %s75
      %s77 = sphi 0, %s75
      %s78 = sphi 0, %s77
      %s92 = sphi 0, %s78
      %s96 = sphi 0, %s96
      %s98 = sphi 0, %s96
      %s99 = sphi 0, %s98
      %s113 = sphi 0, %s99
      %s117 = sphi 0, %s117
      %s119 = sphi 0, %s117
      %s120 = sphi 0, %s119
      %s134 = sphi 0, %s120
      %s138 = sphi 0, %s138
      %s140 = sphi 0, %s138
      %s141 = sphi 0, %s140
      %s155 = sphi 0, %s141
      %s159 = sphi 0, %s159
      %s161 = sphi 0, %s159
      %s162 = sphi 0, %s161
      %s176 = sphi 0, %s162
      %s180 = sphi 0, %s180
      %s182 = sphi 0, %s180
      %s183 = sphi 0, %s182
      %s197 = sphi 0, %s183
      %s201 = sphi 0, %s201
      %s203 = sphi 0, %s201
      %s204 = sphi 0, %s203
      %s218 = sphi 0, %s204
      %s222 = sphi 0, %s222
      %s224 = sphi 0, %s222
      %s225 = sphi 0, %s224
      %s239 = sphi 0, %s225
      %s243 = sphi 0, %s243
      %s245 = sphi 0, %s243
      %s246 = sphi 0, %s245
      %s260 = sphi 0, %s246
      %s266 = sphi 0, %s268
      %s269 = sphi 0, %s266
      %s270 = sphi 0, %s269
      %s286 = sphi 0, %s270
    $region4: #{vit_forward.1} parent=1 // loop_header_branch
      %23 = sbr.rel (%p21) target = $region8
    $region5: #{vit_forward.1} parent=1 // loop_body
      %s25 = ssub.s32 %s20, 1
      %s26 = ssub.s32 %s20, 2
      %s27 = sadd.s32 %s20, 1
      %s28 = ssub.s32 %s20, %s27
      %p29 = scmp.eq.s32.totalorder %s28, 0
      %s31 = sadd.s32 %s30, 1
      %s32 = scalar_select %p29, %s30, %s31
      %p35 = pneg %p29
      %p36 = scmp.eq.s32.totalorder %s20, 1
      %p37 = por %p35, %p36
      %p38 = scmp.ne.s32.totalorder %s30, %s33
      %p39 = scmp.eq.s32.totalorder %s20, 0
      %p40 = por %p38, %p39
      %p41 = scmp.ne.s32.totalorder %s30, %s33
      %p42 = scmp.eq.s32.totalorder %s25, 1
      %p43 = por %p41, %p42
      %p44 = scmp.ne.s32.totalorder %s33, %s34
      %p45 = scmp.eq.s32.totalorder %s25, 0
      %p46 = por %p44, %p45
      %p47 = scmp.ne.s32.totalorder %s33, %s34
      %p48 = scmp.eq.s32.totalorder %s26, 1
      %p49 = por %p47, %p48
      %p51 = scmp.ne.s32.totalorder %s34, %s50
      %p52 = scmp.eq.s32.totalorder %s26, 0
      %p53 = por %p51, %p52
      %s55 = sadd.s32 %s54, 1
      %p58 = scmp.eq.s32.totalorder %s20, 1
      %p59 = scmp.ne.s32.totalorder %s54, %s56
      %p60 = scmp.eq.s32.totalorder %s20, 0
      %p61 = por %p59, %p60
      %p62 = scmp.ne.s32.totalorder %s54, %s56
      %p63 = scmp.eq.s32.totalorder %s25, 1
      %p64 = por %p62, %p63
      %p65 = scmp.ne.s32.totalorder %s56, %s57
      %p66 = scmp.eq.s32.totalorder %s25, 0
      %p67 = por %p65, %p66
      %p68 = scmp.ne.s32.totalorder %s56, %s57
      %p69 = scmp.eq.s32.totalorder %s26, 1
      %p70 = por %p68, %p69
      %p72 = scmp.ne.s32.totalorder %s57, %s71
      %p73 = scmp.eq.s32.totalorder %s26, 0
      %p74 = por %p72, %p73
      %s76 = sadd.s32 %s75, 1
      %p79 = scmp.eq.s32.totalorder %s20, 1
      %p80 = scmp.ne.s32.totalorder %s75, %s77
      %p81 = scmp.eq.s32.totalorder %s20, 0
      %p82 = por %p80, %p81
      %p83 = scmp.ne.s32.totalorder %s75, %s77
      %p84 = scmp.eq.s32.totalorder %s25, 1
      %p85 = por %p83, %p84
      %p86 = scmp.ne.s32.totalorder %s77, %s78
      %p87 = scmp.eq.s32.totalorder %s25, 0
      %p88 = por %p86, %p87
      %p89 = scmp.ne.s32.totalorder %s77, %s78
      %p90 = scmp.eq.s32.totalorder %s26, 1
      %p91 = por %p89, %p90
      %p93 = scmp.ne.s32.totalorder %s78, %s92
      %p94 = scmp.eq.s32.totalorder %s26, 0
      %p95 = por %p93, %p94
      %s97 = sadd.s32 %s96, 1
      %p100 = scmp.eq.s32.totalorder %s20, 1
      %p101 = scmp.ne.s32.totalorder %s96, %s98
      %p102 = scmp.eq.s32.totalorder %s20, 0
      %p103 = por %p101, %p102
      %p104 = scmp.ne.s32.totalorder %s96, %s98
      %p105 = scmp.eq.s32.totalorder %s25, 1
      %p106 = por %p104, %p105
      %p107 = scmp.ne.s32.totalorder %s98, %s99
      %p108 = scmp.eq.s32.totalorder %s25, 0
      %p109 = por %p107, %p108
      %p110 = scmp.ne.s32.totalorder %s98, %s99
      %p111 = scmp.eq.s32.totalorder %s26, 1
      %p112 = por %p110, %p111
      %p114 = scmp.ne.s32.totalorder %s99, %s113
      %p115 = scmp.eq.s32.totalorder %s26, 0
      %p116 = por %p114, %p115
      %s118 = sadd.s32 %s117, 1
      %p121 = scmp.eq.s32.totalorder %s20, 1
      %p122 = scmp.ne.s32.totalorder %s117, %s119
      %p123 = scmp.eq.s32.totalorder %s20, 0
      %p124 = por %p122, %p123
      %p125 = scmp.ne.s32.totalorder %s117, %s119
      %p126 = scmp.eq.s32.totalorder %s25, 1
      %p127 = por %p125, %p126
      %p128 = scmp.ne.s32.totalorder %s119, %s120
      %p129 = scmp.eq.s32.totalorder %s25, 0
      %p130 = por %p128, %p129
      %p131 = scmp.ne.s32.totalorder %s119, %s120
      %p132 = scmp.eq.s32.totalorder %s26, 1
      %p133 = por %p131, %p132
      %p135 = scmp.ne.s32.totalorder %s120, %s134
      %p136 = scmp.eq.s32.totalorder %s26, 0
      %p137 = por %p135, %p136
      %s139 = sadd.s32 %s138, 1
      %p142 = scmp.eq.s32.totalorder %s20, 1
      %p143 = scmp.ne.s32.totalorder %s138, %s140
      %p144 = scmp.eq.s32.totalorder %s20, 0
      %p145 = por %p143, %p144
      %p146 = scmp.ne.s32.totalorder %s138, %s140
      %p147 = scmp.eq.s32.totalorder %s25, 1
      %p148 = por %p146, %p147
      %p149 = scmp.ne.s32.totalorder %s140, %s141
      %p150 = scmp.eq.s32.totalorder %s25, 0
      %p151 = por %p149, %p150
      %p152 = scmp.ne.s32.totalorder %s140, %s141
      %p153 = scmp.eq.s32.totalorder %s26, 1
      %p154 = por %p152, %p153
      %p156 = scmp.ne.s32.totalorder %s141, %s155
      %p157 = scmp.eq.s32.totalorder %s26, 0
      %p158 = por %p156, %p157
      %s160 = sadd.s32 %s159, 1
      %p163 = scmp.eq.s32.totalorder %s20, 1
      %p164 = scmp.ne.s32.totalorder %s159, %s161
      %p165 = scmp.eq.s32.totalorder %s20, 0
      %p166 = por %p164, %p165
      %p167 = scmp.ne.s32.totalorder %s159, %s161
      %p168 = scmp.eq.s32.totalorder %s25, 1
      %p169 = por %p167, %p168
      %p170 = scmp.ne.s32.totalorder %s161, %s162
      %p171 = scmp.eq.s32.totalorder %s25, 0
      %p172 = por %p170, %p171
      %p173 = scmp.ne.s32.totalorder %s161, %s162
      %p174 = scmp.eq.s32.totalorder %s26, 1
      %p175 = por %p173, %p174
      %p177 = scmp.ne.s32.totalorder %s162, %s176
      %p178 = scmp.eq.s32.totalorder %s26, 0
      %p179 = por %p177, %p178
      %s181 = sadd.s32 %s180, 1
      %p184 = scmp.eq.s32.totalorder %s20, 1
      %p185 = scmp.ne.s32.totalorder %s180, %s182
      %p186 = scmp.eq.s32.totalorder %s20, 0
      %p187 = por %p185, %p186
      %p188 = scmp.ne.s32.totalorder %s180, %s182
      %p189 = scmp.eq.s32.totalorder %s25, 1
      %p190 = por %p188, %p189
      %p191 = scmp.ne.s32.totalorder %s182, %s183
      %p192 = scmp.eq.s32.totalorder %s25, 0
      %p193 = por %p191, %p192
      %p194 = scmp.ne.s32.totalorder %s182, %s183
      %p195 = scmp.eq.s32.totalorder %s26, 1
      %p196 = por %p194, %p195
      %p198 = scmp.ne.s32.totalorder %s183, %s197
      %p199 = scmp.eq.s32.totalorder %s26, 0
      %p200 = por %p198, %p199
      %s202 = sadd.s32 %s201, 1
      %p205 = scmp.eq.s32.totalorder %s20, 1
      %p206 = scmp.ne.s32.totalorder %s201, %s203
      %p207 = scmp.eq.s32.totalorder %s20, 0
      %p208 = por %p206, %p207
      %p209 = scmp.ne.s32.totalorder %s201, %s203
      %p210 = scmp.eq.s32.totalorder %s25, 1
      %p211 = por %p209, %p210
      %p212 = scmp.ne.s32.totalorder %s203, %s204
      %p213 = scmp.eq.s32.totalorder %s25, 0
      %p214 = por %p212, %p213
      %p215 = scmp.ne.s32.totalorder %s203, %s204
      %p216 = scmp.eq.s32.totalorder %s26, 1
      %p217 = por %p215, %p216
      %p219 = scmp.ne.s32.totalorder %s204, %s218
      %p220 = scmp.eq.s32.totalorder %s26, 0
      %p221 = por %p219, %p220
      %s223 = sadd.s32 %s222, 1
      %p226 = scmp.eq.s32.totalorder %s20, 1
      %p227 = scmp.ne.s32.totalorder %s222, %s224
      %p228 = scmp.eq.s32.totalorder %s20, 0
      %p229 = por %p227, %p228
      %p230 = scmp.ne.s32.totalorder %s222, %s224
      %p231 = scmp.eq.s32.totalorder %s25, 1
      %p232 = por %p230, %p231
      %p233 = scmp.ne.s32.totalorder %s224, %s225
      %p234 = scmp.eq.s32.totalorder %s25, 0
      %p235 = por %p233, %p234
      %p236 = scmp.ne.s32.totalorder %s224, %s225
      %p237 = scmp.eq.s32.totalorder %s26, 1
      %p238 = por %p236, %p237
      %p240 = scmp.ne.s32.totalorder %s225, %s239
      %p241 = scmp.eq.s32.totalorder %s26, 0
      %p242 = por %p240, %p241
      %s244 = sadd.s32 %s243, 1
      %p247 = scmp.eq.s32.totalorder %s20, 1
      %p248 = scmp.ne.s32.totalorder %s243, %s245
      %p249 = scmp.eq.s32.totalorder %s20, 0
      %p250 = por %p248, %p249
      %p251 = scmp.ne.s32.totalorder %s243, %s245
      %p252 = scmp.eq.s32.totalorder %s25, 1
      %p253 = por %p251, %p252
      %p254 = scmp.ne.s32.totalorder %s245, %s246
      %p255 = scmp.eq.s32.totalorder %s25, 0
      %p256 = por %p254, %p255
      %p257 = scmp.ne.s32.totalorder %s245, %s246
      %p258 = scmp.eq.s32.totalorder %s26, 1
      %p259 = por %p257, %p258
      %p261 = scmp.ne.s32.totalorder %s246, %s260
      %p262 = scmp.eq.s32.totalorder %s26, 0
      %p263 = por %p261, %p262
      %s264 = ssub.s32 %s20, %s27
      %p265 = scmp.eq.s32.totalorder %s264, 0
      %s267 = sadd.s32 %s266, 1
      %s268 = scalar_select %p265, %s266, %s267
      %p271 = pneg %p265
      %p272 = scmp.eq.s32.totalorder %s20, 1
      %p273 = por %p271, %p272
      %p274 = scmp.ne.s32.totalorder %s266, %s269
      %p275 = scmp.eq.s32.totalorder %s20, 0
      %p276 = por %p274, %p275
      %p277 = scmp.ne.s32.totalorder %s266, %s269
      %p278 = scmp.eq.s32.totalorder %s25, 1
      %p279 = por %p277, %p278
      %p280 = scmp.ne.s32.totalorder %s269, %s270
      %p281 = scmp.eq.s32.totalorder %s25, 0
      %p282 = por %p280, %p281
      %p283 = scmp.ne.s32.totalorder %s269, %s270
      %p284 = scmp.eq.s32.totalorder %s26, 1
      %p285 = por %p283, %p284
      %p287 = scmp.ne.s32.totalorder %s270, %s286
      %p288 = scmp.eq.s32.totalorder %s26, 0
      %p289 = por %p287, %p288
      %p290 = scmp.le.s32.totalorder 1, %s20
      %p291 = scmp.lt.s32.totalorder %s20, 3
      %p292 = pnand %p290, %p291
      %p293 = pneg %p292
      // Predicated region
      $region9: #{vit_forward.1} parent=5 // pred_check
        _
      $region10: #{vit_forward.1} parent=5 // pred_check_branch
        %295 = sbr.rel (%p292) target = $region12
      $region11: #{vit_forward.1} parent=5 // pred_region
        %s296 = ssub.s32 %s20, 1
        // Predicated region
        $region13: #{vit_forward.1} parent=11 // pred_check
          %p297 = pneg %p67
        $region14: #{vit_forward.1} parent=11 // pred_check_branch
          %299 = sbr.rel (%p297) target = $region16
        $region15: #{vit_forward.1} parent=11 // pred_region
          _
        $region16: #{vit_forward.1} parent=11 // pred_fallthru
          _
        // Predicated region
        $region17: #{vit_forward.1} parent=11 // pred_check
          %p300 = pneg %p88
        $region18: #{vit_forward.1} parent=11 // pred_check_branch
          %302 = sbr.rel (%p300) target = $region20
        $region19: #{vit_forward.1} parent=11 // pred_region
          _
        $region20: #{vit_forward.1} parent=11 // pred_fallthru
          _
        // Predicated region
        $region21: #{vit_forward.1} parent=11 // pred_check
          %p303 = pneg %p109
        $region22: #{vit_forward.1} parent=11 // pred_check_branch
          %305 = sbr.rel (%p303) target = $region24
        $region23: #{vit_forward.1} parent=11 // pred_region
          _
        $region24: #{vit_forward.1} parent=11 // pred_fallthru
          _
        // Predicated region
        $region25: #{vit_forward.1} parent=11 // pred_check
          %p306 = pneg %p130
        $region26: #{vit_forward.1} parent=11 // pred_check_branch
          %308 = sbr.rel (%p306) target = $region28
        $region27: #{vit_forward.1} parent=11 // pred_region
          _
        $region28: #{vit_forward.1} parent=11 // pred_fallthru
          _
        // Predicated region
        $region29: #{vit_forward.1} parent=11 // pred_check
          %p309 = pneg %p151
        $region30: #{vit_forward.1} parent=11 // pred_check_branch
          %311 = sbr.rel (%p309) target = $region32
        $region31: #{vit_forward.1} parent=11 // pred_region
          _
        $region32: #{vit_forward.1} parent=11 // pred_fallthru
          _
        // Predicated region
        $region33: #{vit_forward.1} parent=11 // pred_check
          %p312 = pneg %p172
        $region34: #{vit_forward.1} parent=11 // pred_check_branch
          %314 = sbr.rel (%p312) target = $region36
        $region35: #{vit_forward.1} parent=11 // pred_region
          _
        $region36: #{vit_forward.1} parent=11 // pred_fallthru
          _
        // Predicated region
        $region37: #{vit_forward.1} parent=11 // pred_check
          %p315 = pneg %p193
        $region38: #{vit_forward.1} parent=11 // pred_check_branch
          %317 = sbr.rel (%p315) target = $region40
        $region39: #{vit_forward.1} parent=11 // pred_region
          _
        $region40: #{vit_forward.1} parent=11 // pred_fallthru
          _
        // Predicated region
        $region41: #{vit_forward.1} parent=11 // pred_check
          %p318 = pneg %p214
        $region42: #{vit_forward.1} parent=11 // pred_check_branch
          %320 = sbr.rel (%p318) target = $region44
        $region43: #{vit_forward.1} parent=11 // pred_region
          _
        $region44: #{vit_forward.1} parent=11 // pred_fallthru
          _
        // Predicated region
        $region45: #{vit_forward.1} parent=11 // pred_check
          %p321 = pneg %p235
        $region46: #{vit_forward.1} parent=11 // pred_check_branch
          %323 = sbr.rel (%p321) target = $region48
        $region47: #{vit_forward.1} parent=11 // pred_region
          _
        $region48: #{vit_forward.1} parent=11 // pred_fallthru
          _
        // Predicated region
        $region49: #{vit_forward.1} parent=11 // pred_check
          %p324 = pneg %p256
        $region50: #{vit_forward.1} parent=11 // pred_check_branch
          %326 = sbr.rel (%p324) target = $region52
        $region51: #{vit_forward.1} parent=11 // pred_region
          _
        $region52: #{vit_forward.1} parent=11 // pred_fallthru
          _
      $region12: #{vit_forward.1} parent=5 // pred_fallthru
        _
      %p327 = scmp.lt.s32.totalorder %s20, 2
      // Predicated region
      $region53: #{vit_forward.1} parent=5 // pred_check
        %p328 = pneg %p327
      $region54: #{vit_forward.1} parent=5 // pred_check_branch
        %330 = sbr.rel (%p328) target = $region56
      $region55: #{vit_forward.1} parent=5 // pred_region
        // Predicated region
        $region57: #{vit_forward.1} parent=55 // pred_check
          %p331 = pneg %p40
        $region58: #{vit_forward.1} parent=55 // pred_check_branch
          %333 = sbr.rel (%p331) target = $region60
        $region59: #{vit_forward.1} parent=55 // pred_region
          %p334 = scmp.lt.s32.totalorder %s20, 1
          %s335 = scalar_select %p334, %s20, 1
          %s336 = smul.addr %s335, 6
          %s337 = smul.addr %s336, 8
          %s338 = scalar_lea.vmem %s0, %s337
        $region60: #{vit_forward.1} parent=55 // pred_fallthru
          _
      $region56: #{vit_forward.1} parent=5 // pred_fallthru
        _
      %p339 = scmp.le.s32.totalorder 1, %s20
      %p340 = scmp.lt.s32.totalorder %s20, 3
      %p341 = pnand %p339, %p340
      %p342 = pneg %p341
      // Predicated region
      $region61: #{vit_forward.1} parent=5 // pred_check
        _
      $region62: #{vit_forward.1} parent=5 // pred_check_branch
        %344 = sbr.rel (%p341) target = $region64
      $region63: #{vit_forward.1} parent=5 // pred_region
        %s345 = ssub.s32 %s20, 1
        %p346 = scmp.lt.s32.totalorder %s25, 1
        %s347 = scalar_select %p346, %s25, 1
        %s348 = smul.addr %s347, 6
        %s349 = smul.addr %s348, 8
        %s350 = scalar_lea.vmem %s0, %s349
        %p351 = pneg %p46
        %p352 = pneg %p43
        %p353 = pneg %p67
        %p354 = pneg %p64
        %p355 = pneg %p88
        %p356 = pneg %p85
        %p357 = pneg %p109
        %p358 = pneg %p106
        %p359 = pneg %p130
        %p360 = pneg %p127
        %p361 = pneg %p151
        %p362 = pneg %p148
        %p363 = pneg %p172
        %p364 = pneg %p169
        %p365 = pneg %p193
        %p366 = pneg %p190
        %p367 = pneg %p214
        %p368 = pneg %p211
        %p369 = pneg %p235
        %p370 = pneg %p232
        %p371 = pneg %p256
        %p372 = pneg %p253
        %p373 = pneg %p282
        %p374 = pneg %p279
        %s375 = sand.u32 %s269, 1
        %s376 = scalar_lea.sflag [#allocation3], %s375
        %s377 = sand.u32 %s269, 1
        %s378 = scalar_lea.vmem [#allocation2], %s377
        %p379 = scmp.lt.s32.totalorder %s25, 1
        %s380 = scalar_select %p379, %s25, 1
        %s381 = smul.addr %s380, 6
        %s382 = smul.addr %s381, 8
        %s383 = scalar_lea.vmem %s0, %s382
        %v384 = vld [vmem:[%s383] sm:$0x1f]
        %v385 = vld [vmem:[%s383 + $0x8] sm:$0x1f]
        %v386 = vld [vmem:[%s383 + $0x10] sm:$0x1f]
        %v387 = vld [vmem:[%s383 + $0x18] sm:$0x1f]
        %v388 = vld [vmem:[%s383 + $0x20] sm:$0x1f]
        %v389 = vld [vmem:[%s383 + $0x28] sm:$0x1f]
        %v390 = vld [vmem:[%s1] sm:$0xff]
        %v391 = vld [vmem:[%s1 + $0x8] sm:$0xff]
        %v392 = vld [vmem:[%s1 + $0x10] sm:$0xff]
        %v393 = vld [vmem:[%s1 + $0x18] sm:$0xff]
        %v394 = vld [vmem:[%s1 + $0x20] sm:$0xff]
        %v395 = vld [vmem:[%s1 + $0x28] sm:$0xff]
        %v396 = vld [vmem:[%s1 + $0x30] sm:$0xff]
        %v397 = vld [vmem:[%s1 + $0x38] sm:$0xff]
        %v398 = vld [vmem:[%s1 + $0x40] sm:$0xff]
        %v399 = vld [vmem:[%s1 + $0x48] sm:$0xff]
        %v400 = vld [vmem:[%s1 + $0x50] sm:$0xff]
        %v401 = vld [vmem:[%s1 + $0x58] sm:$0xff]
        %v402 = vld [vmem:[%s1 + $0x60] sm:$0xff]
        %v403 = vld [vmem:[%s1 + $0x68] sm:$0xff]
        %v404 = vld [vmem:[%s1 + $0x70] sm:$0xff]
        %v405 = vld [vmem:[%s1 + $0x78] sm:$0xff]
        %v406 = vld [vmem:[%s1 + $0x80] sm:$0xff]
        %v407 = vld [vmem:[%s1 + $0x88] sm:$0xff]
        %v408 = vld [vmem:[%s1 + $0x90] sm:$0xff]
        %v409 = vld [vmem:[%s1 + $0x98] sm:$0xff]
        %v410 = vld [vmem:[%s1 + $0xa0] sm:$0xff]
        %v411 = vld [vmem:[%s1 + $0xa8] sm:$0xff]
        %v412 = vld [vmem:[%s1 + $0xb0] sm:$0xff]
        %v413 = vld [vmem:[%s1 + $0xb8] sm:$0xff]
        %v414 = vld [vmem:[%s1 + $0xc0] sm:$0xff]
        %v415 = vld [vmem:[%s1 + $0xc8] sm:$0xff]
        %v416 = vld [vmem:[%s1 + $0xd0] sm:$0xff]
        %v417 = vld [vmem:[%s1 + $0xd8] sm:$0xff]
        %v418 = vld [vmem:[%s1 + $0xe0] sm:$0xff]
        %v419 = vld [vmem:[%s1 + $0xe8] sm:$0xff]
        %v420 = vld [vmem:[%s1 + $0xf0] sm:$0xff]
        %v421 = vld [vmem:[%s1 + $0xf8] sm:$0xff]
        %v422 = vld [vmem:[%s1 + $0x100] sm:$0xff]
        %v423 = vld [vmem:[%s1 + $0x108] sm:$0xff]
        %v424 = vld [vmem:[%s1 + $0x110] sm:$0xff]
        %v425 = vld [vmem:[%s1 + $0x118] sm:$0xff]
        %v426 = vld [vmem:[%s1 + $0x120] sm:$0xff]
        %v427 = vld [vmem:[%s1 + $0x128] sm:$0xff]
        %v428 = vld [vmem:[%s1 + $0x130] sm:$0xff]
        %v429 = vld [vmem:[%s1 + $0x138] sm:$0xff]
        %v430 = vld [vmem:[%s1 + $0x140] sm:$0xff]
        %v431 = vld [vmem:[%s1 + $0x148] sm:$0xff]
        %v432 = vld [vmem:[%s1 + $0x150] sm:$0xff]
        %v433 = vld [vmem:[%s1 + $0x158] sm:$0xff]
        %v434 = vld [vmem:[%s1 + $0x160] sm:$0xff]
        %v435 = vld [vmem:[%s1 + $0x168] sm:$0xff]
        %v436 = vld [vmem:[%s1 + $0x170] sm:$0xff]
        %v437 = vld [vmem:[%s1 + $0x178] sm:$0xff]
        %v438 = vld [vmem:[%s1 + $0x180] sm:$0xff]
        %v439 = vld [vmem:[%s1 + $0x188] sm:$0xff]
        %v440 = vld [vmem:[%s1 + $0x190] sm:$0xff]
        %v441 = vld [vmem:[%s1 + $0x198] sm:$0xff]
        %v442 = vld [vmem:[%s1 + $0x1a0] sm:$0xff]
        %v443 = vld [vmem:[%s1 + $0x1a8] sm:$0xff]
        %v444 = vld [vmem:[%s1 + $0x1b0] sm:$0xff]
        %v445 = vld [vmem:[%s1 + $0x1b8] sm:$0xff]
        %v446 = vld [vmem:[%s1 + $0x1c0] sm:$0xff]
        %v447 = vld [vmem:[%s1 + $0x1c8] sm:$0xff]
        %v448 = vld [vmem:[%s1 + $0x1d0] sm:$0xff]
        %v449 = vld [vmem:[%s1 + $0x1d8] sm:$0xff]
        %v450 = vld [vmem:[%s1 + $0x1e0] sm:$0xff]
        %v451 = vld [vmem:[%s1 + $0x1e8] sm:$0xff]
        %v452 = vld [vmem:[%s1 + $0x1f0] sm:$0xff]
        %v453 = vld [vmem:[%s1 + $0x1f8] sm:$0xff]
        %v454 = vld [vmem:[%s1 + $0x200] sm:$0xff]
        %v455 = vld [vmem:[%s1 + $0x208] sm:$0xff]
        %v456 = vld [vmem:[%s1 + $0x210] sm:$0xff]
        %v457 = vld [vmem:[%s1 + $0x218] sm:$0xff]
        %v458 = vld [vmem:[%s1 + $0x220] sm:$0xff]
        %v459 = vld [vmem:[%s1 + $0x228] sm:$0xff]
        %v460 = vld [vmem:[%s1 + $0x230] sm:$0xff]
        %v461 = vld [vmem:[%s1 + $0x238] sm:$0xff]
        %v462 = vld [vmem:[%s1 + $0x240] sm:$0xff]
        %v463 = vld [vmem:[%s1 + $0x248] sm:$0xff]
        %v464 = vld [vmem:[%s1 + $0x250] sm:$0xff]
        %v465 = vld [vmem:[%s1 + $0x258] sm:$0xff]
        %v466 = vld [vmem:[%s1 + $0x260] sm:$0xff]
        %v467 = vld [vmem:[%s1 + $0x268] sm:$0xff]
        %v468 = vld [vmem:[%s1 + $0x270] sm:$0xff]
        %v469 = vld [vmem:[%s1 + $0x278] sm:$0xff]
        %v470 = vld [vmem:[%s1 + $0x280] sm:$0xff]
        %v471 = vld [vmem:[%s1 + $0x288] sm:$0xff]
        %v472 = vld [vmem:[%s1 + $0x290] sm:$0xff]
        %v473 = vld [vmem:[%s1 + $0x298] sm:$0xff]
        %v474 = vld [vmem:[%s1 + $0x2a0] sm:$0xff]
        %v475 = vld [vmem:[%s1 + $0x2a8] sm:$0xff]
        %v476 = vld [vmem:[%s1 + $0x2b0] sm:$0xff]
        %v477 = vld [vmem:[%s1 + $0x2b8] sm:$0xff]
        %v478 = vld [vmem:[%s1 + $0x2c0] sm:$0xff]
        %v479 = vld [vmem:[%s1 + $0x2c8] sm:$0xff]
        %v480 = vld [vmem:[%s1 + $0x2d0] sm:$0xff]
        %v481 = vld [vmem:[%s1 + $0x2d8] sm:$0xff]
        %v482 = vld [vmem:[%s1 + $0x2e0] sm:$0xff]
        %v483 = vld [vmem:[%s1 + $0x2e8] sm:$0xff]
        %v484 = vld [vmem:[%s1 + $0x2f0] sm:$0xff]
        %v485 = vld [vmem:[%s1 + $0x2f8] sm:$0xff]
        %v486 = vld [vmem:[%s2] sm:$0x1f]
        %487 = vmatprep.subr.mxu0 0.0
        %488 = vmatpush1.msra.mxu0 %v390
        %489 = vmatprep.subr.mxu0 0.0
        %490 = vmatpush1.msra.mxu0 %v391
        %491 = vmatprep.subr.mxu0 0.0
        %492 = vmatpush1.msra.mxu0 %v392
        %493 = vmatprep.subr.mxu0 0.0
        %494 = vmatpush1.msra.mxu0 %v393
        %495 = vmatprep.subr.mxu0 0.0
        %496 = vmatpush1.msra.mxu0 %v394
        %497 = vmatprep.subr.mxu0 0.0
        %498 = vmatpush1.msra.mxu0 %v395
        %499 = vmatprep.subr.mxu0 0.0
        %500 = vmatpush1.msra.mxu0 %v396
        %501 = vmatprep.subr.mxu0 0.0
        %502 = vmatpush1.msra.mxu0 %v397
        %503 = vmatprep.subr.mxu0 0.0
        %504 = vmatpush1.msra.mxu0 %v398
        %505 = vmatprep.subr.mxu0 0.0
        %506 = vmatpush1.msra.mxu0 %v399
        %507 = vmatprep.subr.mxu0 0.0
        %508 = vmatpush1.msra.mxu0 %v400
        %509 = vmatprep.subr.mxu0 0.0
        %510 = vmatpush1.msra.mxu0 %v401
        %511 = vmatprep.subr.mxu0 0.0
        %512 = vmatpush1.msra.mxu0 %v402
        %513 = vmatprep.subr.mxu0 0.0
        %514 = vmatpush1.msra.mxu0 %v403
        %515 = vmatprep.subr.mxu0 0.0
        %516 = vmatpush1.msra.mxu0 %v404
        %517 = vmatprep.subr.mxu0 0.0
        %518 = vmatpush1.msra.mxu0 %v405
        %519 = vmatprep.subr.mxu0 0.0
        %520 = vmatpush1.msra.mxu0 %v406
        %521 = vmatprep.subr.mxu0 0.0
        %522 = vmatpush1.msra.mxu0 %v407
        %523 = vmatprep.subr.mxu0 0.0
        %524 = vmatpush1.msra.mxu0 %v408
        %525 = vmatprep.subr.mxu0 0.0
        %526 = vmatpush1.msra.mxu0 %v409
        %527 = vmatprep.subr.mxu0 0.0
        %528 = vmatpush1.msra.mxu0 %v410
        %529 = vmatprep.subr.mxu0 0.0
        %530 = vmatpush1.msra.mxu0 %v411
        %531 = vmatprep.subr.mxu0 0.0
        %532 = vmatpush1.msra.mxu0 %v412
        %533 = vmatprep.subr.mxu0 0.0
        %534 = vmatpush1.msra.mxu0 %v413
        %535 = vmatprep.subr.mxu0 0.0
        %536 = vmatpush1.msra.mxu0 %v414
        %537 = vmatprep.subr.mxu0 0.0
        %538 = vmatpush1.msra.mxu0 %v415
        %539 = vmatprep.subr.mxu0 0.0
        %540 = vmatpush1.msra.mxu0 %v416
        %541 = vmatprep.subr.mxu0 0.0
        %542 = vmatpush1.msra.mxu0 %v417
        %543 = vmatprep.subr.mxu0 0.0
        %544 = vmatpush1.msra.mxu0 %v418
        %545 = vmatprep.subr.mxu0 0.0
        %546 = vmatpush1.msra.mxu0 %v419
        %547 = vmatprep.subr.mxu0 0.0
        %548 = vmatpush1.msra.mxu0 %v420
        %549 = vmatprep.subr.mxu0 0.0
        %550 = vmatpush1.msra.mxu0 %v421
        %551 = vmatprep.mubr.f32.mxu0 %v385
        %552 = vmatmul.mubr.f32.gmra.mrb[0].mxu0 %v384
        %v553 = vpop.f32.mrb[0].mxu0
        %v554 = vadd.f32 %v486, %v553
        %v555 = vpop.f32.mrb[0].mxu0
        %556 = vdwg.mxu0
        %557 = vmatprep.subr.mxu0 0.0
        %558 = vmatpush1.msra.mxu0 %v422
        %559 = vmatprep.subr.mxu0 0.0
        %560 = vmatpush1.msra.mxu0 %v423
        %561 = vmatprep.subr.mxu0 0.0
        %562 = vmatpush1.msra.mxu0 %v424
        %563 = vmatprep.subr.mxu0 0.0
        %564 = vmatpush1.msra.mxu0 %v425
        %565 = vmatprep.subr.mxu0 0.0
        %566 = vmatpush1.msra.mxu0 %v426
        %567 = vmatprep.subr.mxu0 0.0
        %568 = vmatpush1.msra.mxu0 %v427
        %569 = vmatprep.subr.mxu0 0.0
        %570 = vmatpush1.msra.mxu0 %v428
        %571 = vmatprep.subr.mxu0 0.0
        %572 = vmatpush1.msra.mxu0 %v429
        %573 = vmatprep.subr.mxu0 0.0
        %574 = vmatpush1.msra.mxu0 %v430
        %575 = vmatprep.subr.mxu0 0.0
        %576 = vmatpush1.msra.mxu0 %v431
        %577 = vmatprep.subr.mxu0 0.0
        %578 = vmatpush1.msra.mxu0 %v432
        %579 = vmatprep.subr.mxu0 0.0
        %580 = vmatpush1.msra.mxu0 %v433
        %581 = vmatprep.subr.mxu0 0.0
        %582 = vmatpush1.msra.mxu0 %v434
        %583 = vmatprep.subr.mxu0 0.0
        %584 = vmatpush1.msra.mxu0 %v435
        %585 = vmatprep.subr.mxu0 0.0
        %586 = vmatpush1.msra.mxu0 %v436
        %587 = vmatprep.subr.mxu0 0.0
        %588 = vmatpush1.msra.mxu0 %v437
        %589 = vmatprep.subr.mxu0 0.0
        %590 = vmatpush1.msra.mxu0 %v438
        %591 = vmatprep.subr.mxu0 0.0
        %592 = vmatpush1.msra.mxu0 %v439
        %593 = vmatprep.subr.mxu0 0.0
        %594 = vmatpush1.msra.mxu0 %v440
        %595 = vmatprep.subr.mxu0 0.0
        %596 = vmatpush1.msra.mxu0 %v441
        %597 = vmatprep.subr.mxu0 0.0
        %598 = vmatpush1.msra.mxu0 %v442
        %599 = vmatprep.subr.mxu0 0.0
        %600 = vmatpush1.msra.mxu0 %v443
        %601 = vmatprep.subr.mxu0 0.0
        %602 = vmatpush1.msra.mxu0 %v444
        %603 = vmatprep.subr.mxu0 0.0
        %604 = vmatpush1.msra.mxu0 %v445
        %605 = vmatprep.subr.mxu0 0.0
        %606 = vmatpush1.msra.mxu0 %v446
        %607 = vmatprep.subr.mxu0 0.0
        %608 = vmatpush1.msra.mxu0 %v447
        %609 = vmatprep.subr.mxu0 0.0
        %610 = vmatpush1.msra.mxu0 %v448
        %611 = vmatprep.subr.mxu0 0.0
        %612 = vmatpush1.msra.mxu0 %v449
        %613 = vmatprep.subr.mxu0 0.0
        %614 = vmatpush1.msra.mxu0 %v450
        %615 = vmatprep.subr.mxu0 0.0
        %616 = vmatpush1.msra.mxu0 %v451
        %617 = vmatprep.subr.mxu0 0.0
        %618 = vmatpush1.msra.mxu0 %v452
        %619 = vmatprep.subr.mxu0 0.0
        %620 = vmatpush1.msra.mxu0 %v453
        %621 = vmatprep.mubr.f32.mxu0 %v387
        %622 = vmatmul.mubr.f32.gmra.mrb[0].mxu0 %v386
        %v623 = vpop.f32.mrb[0].mxu0
        %v624 = vadd.f32 %v554, %v623
        %v625 = vpop.f32.mrb[0].mxu0
        %626 = vdwg.mxu0
        %627 = vmatprep.subr.mxu0 0.0
        %628 = vmatpush1.msra.mxu0 %v454
        %629 = vmatprep.subr.mxu0 0.0
        %630 = vmatpush1.msra.mxu0 %v455
        %631 = vmatprep.subr.mxu0 0.0
        %632 = vmatpush1.msra.mxu0 %v456
        %633 = vmatprep.subr.mxu0 0.0
        %634 = vmatpush1.msra.mxu0 %v457
        %635 = vmatprep.subr.mxu0 0.0
        %636 = vmatpush1.msra.mxu0 %v458
        %637 = vmatprep.subr.mxu0 0.0
        %638 = vmatpush1.msra.mxu0 %v459
        %639 = vmatprep.subr.mxu0 0.0
        %640 = vmatpush1.msra.mxu0 %v460
        %641 = vmatprep.subr.mxu0 0.0
        %642 = vmatpush1.msra.mxu0 %v461
        %643 = vmatprep.subr.mxu0 0.0
        %644 = vmatpush1.msra.mxu0 %v462
        %645 = vmatprep.subr.mxu0 0.0
        %646 = vmatpush1.msra.mxu0 %v463
        %647 = vmatprep.subr.mxu0 0.0
        %648 = vmatpush1.msra.mxu0 %v464
        %649 = vmatprep.subr.mxu0 0.0
        %650 = vmatpush1.msra.mxu0 %v465
        %651 = vmatprep.subr.mxu0 0.0
        %652 = vmatpush1.msra.mxu0 %v466
        %653 = vmatprep.subr.mxu0 0.0
        %654 = vmatpush1.msra.mxu0 %v467
        %655 = vmatprep.subr.mxu0 0.0
        %656 = vmatpush1.msra.mxu0 %v468
        %657 = vmatprep.subr.mxu0 0.0
        %658 = vmatpush1.msra.mxu0 %v469
        %659 = vmatprep.subr.mxu0 0.0
        %660 = vmatpush1.msra.mxu0 %v470
        %661 = vmatprep.subr.mxu0 0.0
        %662 = vmatpush1.msra.mxu0 %v471
        %663 = vmatprep.subr.mxu0 0.0
        %664 = vmatpush1.msra.mxu0 %v472
        %665 = vmatprep.subr.mxu0 0.0
        %666 = vmatpush1.msra.mxu0 %v473
        %667 = vmatprep.subr.mxu0 0.0
        %668 = vmatpush1.msra.mxu0 %v474
        %669 = vmatprep.subr.mxu0 0.0
        %670 = vmatpush1.msra.mxu0 %v475
        %671 = vmatprep.subr.mxu0 0.0
        %672 = vmatpush1.msra.mxu0 %v476
        %673 = vmatprep.subr.mxu0 0.0
        %674 = vmatpush1.msra.mxu0 %v477
        %675 = vmatprep.subr.mxu0 0.0
        %676 = vmatpush1.msra.mxu0 %v478
        %677 = vmatprep.subr.mxu0 0.0
        %678 = vmatpush1.msra.mxu0 %v479
        %679 = vmatprep.subr.mxu0 0.0
        %680 = vmatpush1.msra.mxu0 %v480
        %681 = vmatprep.subr.mxu0 0.0
        %682 = vmatpush1.msra.mxu0 %v481
        %683 = vmatprep.subr.mxu0 0.0
        %684 = vmatpush1.msra.mxu0 %v482
        %685 = vmatprep.subr.mxu0 0.0
        %686 = vmatpush1.msra.mxu0 %v483
        %687 = vmatprep.subr.mxu0 0.0
        %688 = vmatpush1.msra.mxu0 %v484
        %689 = vmatprep.subr.mxu0 0.0
        %690 = vmatpush1.msra.mxu0 %v485
        %691 = vmatprep.mubr.f32.mxu0 %v389
        %692 = vmatmul.mubr.f32.gmra.mrb[0].mxu0 %v388
        %v693 = vpop.f32.mrb[0].mxu0
        %v694 = vadd.f32 %v624, %v693
        %v695 = vpop.f32.mrb[0].mxu0
        %696 = vdwg.mxu0
        %v697 = vld [vmem:[%s6] sm:$0xff]
        %v698 = vld [vmem:[%s6 + $0x8] sm:$0xff]
        %v699 = vld [vmem:[%s6 + $0x10] sm:$0xf]
        %v700 = vld [vmem:[%s2 + $0x5] sm:$0x1]
        %v701 = vld [vmem:[%s2 + $0x6] sm:$0x1]
        %vm702 = vcmask 258048
        %v703 = vsel %vm702, %v694, 0.0
        %704 = vadd.xlane.f32.xlu0 %v703
        %v705 = vpop.xlane.xlu0 %704
        %v706 = vrcp.pop 32.0
        %v707 = vmul.f32 %v705, %v706
        %v708 = vsub.f32 %v694, %v707
        %v709 = vmul.f32 %v708, %v708
        %v710 = vsel %vm702, %v709, 0.0
        %711 = vadd.xlane.f32.xlu0 %v710
        %v712 = vpop.xlane.xlu0 %711
        %v713 = vmul.f32 %v712, %v706
        %v714 = vadd.f32 %v713, 1e-06
        %v715 = vrsqrt.pop %v714
        %v716 = vmul.f32 %v708, %v715
        %v717 = vlaneseq
        %v718 = vshrl.u32 %v717, 7
        %v719 = vsub.s32 0, %v718
        %v720 = vrot.slane %v700, %v719
        %v721 = vmul.f32 %v716, %v720
        %v722 = vlaneseq
        %v723 = vshrl.u32 %v722, 7
        %v724 = vsub.s32 0, %v723
        %v725 = vrot.slane %v701, %v724
        %v726 = vadd.f32 %v721, %v725
        %v727 = vld [vmem:[%s4] sm:$0xff]
        %v728 = vld [vmem:[%s4 + $0x8] sm:$0xff]
        %v729 = vld [vmem:[%s4 + $0x10] sm:$0xff]
        %v730 = vld [vmem:[%s4 + $0x18] sm:$0xff]
        %v731 = vld [vmem:[%s5] sm:$0x1]
        %v733 = vlaneseq
        %v734 = vshrl.u32 %v733, 7
        %v735 = vsub.s32 0, %v734
        %v736 = vrot.slane %v731, %v735
        %vm738 = vcmask 261120
        %v740 = vsel %vm738, %v726, 0
        %742 = vmatprep.subr.mxu0 0.0
        %743 = vmatpush1.msra.mxu0 %v727
        %744 = vmatprep.subr.mxu0 0.0
        %745 = vmatpush1.msra.mxu0 %v728
        %746 = vmatprep.subr.mxu0 0.0
        %747 = vmatpush1.msra.mxu0 %v729
        %748 = vmatprep.subr.mxu0 0.0
        %749 = vmatpush1.msra.mxu0 %v730
        %750 = vmatprep.subr.mxu0 0.0
        %751 = vmatpush1.msra.mxu0 0.0
        %752 = vmatprep.subr.mxu0 0.0
        %753 = vmatpush1.msra.mxu0 0.0
        %754 = vmatprep.subr.mxu0 0.0
        %755 = vmatpush1.msra.mxu0 0.0
        %756 = vmatprep.subr.mxu0 0.0
        %757 = vmatpush1.msra.mxu0 0.0
        %758 = vmatprep.subr.mxu0 0.0
        %759 = vmatpush1.msra.mxu0 0.0
        %760 = vmatprep.subr.mxu0 0.0
        %761 = vmatpush1.msra.mxu0 0.0
        %762 = vmatprep.subr.mxu0 0.0
        %763 = vmatpush1.msra.mxu0 0.0
        %764 = vmatprep.subr.mxu0 0.0
        %765 = vmatpush1.msra.mxu0 0.0
        %766 = vmatprep.subr.mxu0 0.0
        %767 = vmatpush1.msra.mxu0 0.0
        %768 = vmatprep.subr.mxu0 0.0
        %769 = vmatpush1.msra.mxu0 0.0
        %770 = vmatprep.subr.mxu0 0.0
        %771 = vmatpush1.msra.mxu0 0.0
        %772 = vmatprep.subr.mxu0 0.0
        %773 = vmatpush1.msra.mxu0 0.0
        %774 = vmatprep.subr.mxu0 0.0
        %775 = vmatpush1.msra.mxu0 0.0
        %776 = vmatprep.subr.mxu0 0.0
        %777 = vmatpush1.msra.mxu0 0.0
        %778 = vmatprep.subr.mxu0 0.0
        %779 = vmatpush1.msra.mxu0 0.0
        %780 = vmatprep.subr.mxu0 0.0
        %781 = vmatpush1.msra.mxu0 0.0
        %782 = vmatprep.subr.mxu0 0.0
        %783 = vmatpush1.msra.mxu0 0.0
        %784 = vmatprep.subr.mxu0 0.0
        %785 = vmatpush1.msra.mxu0 0.0
        %786 = vmatprep.subr.mxu0 0.0
        %787 = vmatpush1.msra.mxu0 0.0
        %788 = vmatprep.subr.mxu0 0.0
        %789 = vmatpush1.msra.mxu0 0.0
        %790 = vmatprep.subr.mxu0 0.0
        %791 = vmatpush1.msra.mxu0 0.0
        %792 = vmatprep.subr.mxu0 0.0
        %793 = vmatpush1.msra.mxu0 0.0
        %794 = vmatprep.subr.mxu0 0.0
        %795 = vmatpush1.msra.mxu0 0.0
        %796 = vmatprep.subr.mxu0 0.0
        %797 = vmatpush1.msra.mxu0 0.0
        %798 = vmatprep.subr.mxu0 0.0
        %799 = vmatpush1.msra.mxu0 0.0
        %800 = vmatprep.subr.mxu0 0.0
        %801 = vmatpush1.msra.mxu0 0.0
        %802 = vmatprep.subr.mxu0 0.0
        %803 = vmatpush1.msra.mxu0 0.0
        %804 = vmatprep.subr.mxu0 0.0
        %805 = vmatpush1.msra.mxu0 0.0
        %806 = vmatprep.mubr.f32.mxu0 0.0
        %807 = vmatmul.mubr.f32.gmra.mrb[0].mxu0 %v740
        %v808 = vpop.f32.mrb[0].mxu0
        %v809 = vadd.f32 %v736, %v808
        %v810 = vpop.f32.mrb[0].mxu0
        %811 = vdwg.mxu0
        %v813 = vrot.slane %v809, 3
        %814 = vrot.lane.b32.xlu0 %v813, 104
        %v815 = vpop.permute.xlu0 %814
        %v817 = vrot.slane %v809, 6
        %818 = vrot.lane.b32.xlu0 %v817, 80
        %v819 = vpop.permute.xlu0 %818
        %v821 = vrot.slane %v809, 1
        %822 = vrot.lane.b32.xlu0 %v821, 56
        %v823 = vpop.permute.xlu0 %822
        %vm825 = vcmask 1044480
        %v826 = vsel %vm825, %v809, %v815
        %vm827 = vcmask 1041408
        %v828 = vsel %vm827, %v815, %v819
        %vm829 = vcmask 1046528
        %v830 = vsel %vm829, %v828, %v823
        %833 = vrot.lane.b32.xlu0 %v826, 120
        %v834 = vpop.permute.xlu0 %833
        %835 = vrot.lane.b32.xlu0 %v830, 120
        %v836 = vpop.permute.xlu0 %835
        %837 = vrot.lane.b32.xlu0 %v823, 120
        %v838 = vpop.permute.xlu0 %837
        %vm839 = vcmask 64512
        %v840 = vsel %vm839, %v826, 0
        %v842 = vsel %vm839, %v830, 0
        %v844 = vsel %vm839, %v823, 0
        %v846 = vsel %vm839, %v834, 0
        %v848 = vsel %vm839, %v836, 0
        %v850 = vsel %vm839, %v838, 0
        %852 = vmatprep.subr.mxu0 0.0
        %853 = vmatpush1.xpose.msra.mxu0 %v846
        %854 = vmatprep.subr.mxu0 0.0
        %855 = vmatpush1.xpose.msra.mxu0 %v848
        %856 = vmatprep.subr.mxu0 0.0
        %857 = vmatpush1.xpose.msra.mxu0 %v850
        %858 = vmatprep.subr.mxu0 0.0
        %859 = vmatpush1.xpose.msra.mxu0 0.0
        %860 = vmatprep.subr.mxu0 0.0
        %861 = vmatpush1.xpose.msra.mxu0 0.0
        %862 = vmatprep.subr.mxu0 0.0
        %863 = vmatpush1.xpose.msra.mxu0 0.0
        %864 = vmatprep.subr.mxu0 0.0
        %865 = vmatpush1.xpose.msra.mxu0 0.0
        %866 = vmatprep.subr.mxu0 0.0
        %867 = vmatpush1.xpose.msra.mxu0 0.0
        %868 = vmatprep.subr.mxu0 0.0
        %869 = vmatpush1.xpose.msra.mxu0 0.0
        %870 = vmatprep.subr.mxu0 0.0
        %871 = vmatpush1.xpose.msra.mxu0 0.0
        %872 = vmatprep.subr.mxu0 0.0
        %873 = vmatpush1.xpose.msra.mxu0 0.0
        %874 = vmatprep.subr.mxu0 0.0
        %875 = vmatpush1.xpose.msra.mxu0 0.0
        %876 = vmatprep.subr.mxu0 0.0
        %877 = vmatpush1.xpose.msra.mxu0 0.0
        %878 = vmatprep.subr.mxu0 0.0
        %879 = vmatpush1.xpose.msra.mxu0 0.0
        %880 = vmatprep.subr.mxu0 0.0
        %881 = vmatpush1.xpose.msra.mxu0 0.0
        %882 = vmatprep.subr.mxu0 0.0
        %883 = vmatpush1.xpose.msra.mxu0 0.0
        %884 = vmatprep.subr.mxu0 0.0
        %885 = vmatpush1.xpose.msra.mxu0 0.0
        %886 = vmatprep.subr.mxu0 0.0
        %887 = vmatpush1.xpose.msra.mxu0 0.0
        %888 = vmatprep.subr.mxu0 0.0
        %889 = vmatpush1.xpose.msra.mxu0 0.0
        %890 = vmatprep.subr.mxu0 0.0
        %891 = vmatpush1.xpose.msra.mxu0 0.0
        %892 = vmatprep.subr.mxu0 0.0
        %893 = vmatpush1.xpose.msra.mxu0 0.0
        %894 = vmatprep.subr.mxu0 0.0
        %895 = vmatpush1.xpose.msra.mxu0 0.0
        %896 = vmatprep.subr.mxu0 0.0
        %897 = vmatpush1.xpose.msra.mxu0 0.0
        %898 = vmatprep.subr.mxu0 0.0
        %899 = vmatpush1.xpose.msra.mxu0 0.0
        %900 = vmatprep.subr.mxu0 0.0
        %901 = vmatpush1.xpose.msra.mxu0 0.0
        %902 = vmatprep.subr.mxu0 0.0
        %903 = vmatpush1.xpose.msra.mxu0 0.0
        %904 = vmatprep.subr.mxu0 0.0
        %905 = vmatpush1.xpose.msra.mxu0 0.0
        %906 = vmatprep.subr.mxu0 0.0
        %907 = vmatpush1.xpose.msra.mxu0 0.0
        %908 = vmatprep.subr.mxu0 0.0
        %909 = vmatpush1.xpose.msra.mxu0 0.0
        %910 = vmatprep.subr.mxu0 0.0
        %911 = vmatpush1.xpose.msra.mxu0 0.0
        %912 = vmatprep.subr.mxu0 0.0
        %913 = vmatpush1.xpose.msra.mxu0 0.0
        %914 = vmatprep.subr.mxu0 0.0
        %915 = vmatpush1.xpose.msra.mxu0 0.0
        %916 = vmatprep.mubr.f32.mxu0 0.0
        %917 = vmatmul.mubr.f32.gmra.mrb[0].mxu0 %v840
        %v918 = vpop.f32.mrb[0].mxu0
        %v919 = vadd.f32 0.0, %v918
        %v920 = vpop.f32.mrb[0].mxu0
        %921 = vmatprep.mubr.f32.mxu0 0.0
        %922 = vmatmul.mubr.f32.gmra.mrb[0].mxu0 %v842
        %v923 = vpop.f32.mrb[0].mxu0
        %v924 = vadd.f32 0.0, %v923
        %v925 = vpop.f32.mrb[0].mxu0
        %926 = vmatprep.mubr.f32.mxu0 0.0
        %927 = vmatmul.mubr.f32.gmra.mrb[0].mxu0 %v844
        %v928 = vpop.f32.mrb[0].mxu0
        %v929 = vadd.f32 0.0, %v928
        %v930 = vpop.f32.mrb[0].mxu0
        %931 = vdwg.mxu0
        %v932 = vmul.f32 %v919, 0.35355338
        %v933 = vmul.f32 %v924, 0.35355338
        %v934 = vmul.f32 %v929, 0.35355338
        %v935 = vadd.f32 %v932, %v697
        %v936 = vadd.f32 %v933, %v698
        %v937 = vadd.f32 %v934, %v699
        %vm938 = vcmask 162816
        %v939 = vsel %vm938, %v935, -inf
        %940 = vmax.xlane.f32.xlu0 %v939
        %v941 = vpop.xlane.xlu0 %940
        %v942 = vsel %vm938, %v936, -inf
        %943 = vmax.xlane.f32.xlu0 %v942
        %v944 = vpop.xlane.xlu0 %943
        %vm945 = vcmask 158720
        %v946 = vsel %vm945, %v937, -inf
        %947 = vmax.xlane.f32.xlu0 %v946
        %v948 = vpop.xlane.xlu0 %947
        %v949 = vsub.f32 %v935, %v941
        %v950 = vsub.f32 %v936, %v944
        %v951 = vsub.f32 %v937, %v948
        %v952 = vmul.f32 %v949, 1.442695
        %v953 = vpow.pop %v952
        %v954 = vmul.f32 %v950, 1.442695
        %v955 = vpow.pop %v954
        %v956 = vmul.f32 %v951, 1.442695
        %v957 = vpow.pop %v956
        %v958 = vsel %vm938, %v953, 0.0
        %959 = vadd.xlane.f32.xlu0 %v958
        %v960 = vpop.xlane.xlu0 %959
        %v961 = vsel %vm938, %v955, 0.0
        %962 = vadd.xlane.f32.xlu0 %v961
        %v963 = vpop.xlane.xlu0 %962
        %v964 = vsel %vm945, %v957, 0.0
        %965 = vadd.xlane.f32.xlu0 %v964
        %v966 = vpop.xlane.xlu0 %965
        %v967 = vrcp.pop %v960
        %v968 = vrcp.pop %v963
        %v969 = vrcp.pop %v966
        %v970 = vmul.f32 %v953, %v967
        %v971 = vmul.f32 %v955, %v968
        %v972 = vmul.f32 %v957, %v969
        %973 = vrot.lane.b32.xlu0 %v826, 112
        %v974 = vpop.permute.xlu0 %973
        %975 = vrot.lane.b32.xlu0 %v830, 112
        %v976 = vpop.permute.xlu0 %975
        %977 = vrot.lane.b32.xlu0 %v823, 112
        %v978 = vpop.permute.xlu0 %977
        %v982 = vsel %vm938, %v970, 0
        %v985 = vsel %vm938, %v971, 0
        %v988 = vsel %vm938, %v972, 0
        %vm990 = vcmask 1043456
        %v991 = vsel %vm990, %v978, 0
        %993 = vmatprep.subr.mxu0 0.0
        %994 = vmatpush1.msra.mxu0 %v974
        %995 = vmatprep.subr.mxu0 0.0
        %996 = vmatpush1.msra.mxu0 %v976
        %997 = vmatprep.subr.mxu0 0.0
        %998 = vmatpush1.msra.mxu0 %v991
        %999 = vmatprep.subr.mxu0 0.0
        %1000 = vmatpush1.msra.mxu0 0.0
        %1001 = vmatprep.subr.mxu0 0.0
        %1002 = vmatpush1.msra.mxu0 0.0
        %1003 = vmatprep.subr.mxu0 0.0
        %1004 = vmatpush1.msra.mxu0 0.0
        %1005 = vmatprep.subr.mxu0 0.0
        %1006 = vmatpush1.msra.mxu0 0.0
        %1007 = vmatprep.subr.mxu0 0.0
        %1008 = vmatpush1.msra.mxu0 0.0
        %1009 = vmatprep.subr.mxu0 0.0
        %1010 = vmatpush1.msra.mxu0 0.0
        %1011 = vmatprep.subr.mxu0 0.0
        %1012 = vmatpush1.msra.mxu0 0.0
        %1013 = vmatprep.subr.mxu0 0.0
        %1014 = vmatpush1.msra.mxu0 0.0
        %1015 = vmatprep.subr.mxu0 0.0
        %1016 = vmatpush1.msra.mxu0 0.0
        %1017 = vmatprep.subr.mxu0 0.0
        %1018 = vmatpush1.msra.mxu0 0.0
        %1019 = vmatprep.subr.mxu0 0.0
        %1020 = vmatpush1.msra.mxu0 0.0
        %1021 = vmatprep.subr.mxu0 0.0
        %1022 = vmatpush1.msra.mxu0 0.0
        %1023 = vmatprep.subr.mxu0 0.0
        %1024 = vmatpush1.msra.mxu0 0.0
        %1025 = vmatprep.subr.mxu0 0.0
        %1026 = vmatpush1.msra.mxu0 0.0
        %1027 = vmatprep.subr.mxu0 0.0
        %1028 = vmatpush1.msra.mxu0 0.0
        %1029 = vmatprep.subr.mxu0 0.0
        %1030 = vmatpush1.msra.mxu0 0.0
        %1031 = vmatprep.subr.mxu0 0.0
        %1032 = vmatpush1.msra.mxu0 0.0
        %1033 = vmatprep.subr.mxu0 0.0
        %1034 = vmatpush1.msra.mxu0 0.0
        %1035 = vmatprep.subr.mxu0 0.0
        %1036 = vmatpush1.msra.mxu0 0.0
        %1037 = vmatprep.subr.mxu0 0.0
        %1038 = vmatpush1.msra.mxu0 0.0
        %1039 = vmatprep.subr.mxu0 0.0
        %1040 = vmatpush1.msra.mxu0 0.0
        %1041 = vmatprep.subr.mxu0 0.0
        %1042 = vmatpush1.msra.mxu0 0.0
        %1043 = vmatprep.subr.mxu0 0.0
        %1044 = vmatpush1.msra.mxu0 0.0
        %1045 = vmatprep.subr.mxu0 0.0
        %1046 = vmatpush1.msra.mxu0 0.0
        %1047 = vmatprep.subr.mxu0 0.0
        %1048 = vmatpush1.msra.mxu0 0.0
        %1049 = vmatprep.subr.mxu0 0.0
        %1050 = vmatpush1.msra.mxu0 0.0
        %1051 = vmatprep.subr.mxu0 0.0
        %1052 = vmatpush1.msra.mxu0 0.0
        %1053 = vmatprep.subr.mxu0 0.0
        %1054 = vmatpush1.msra.mxu0 0.0
        %1055 = vmatprep.subr.mxu0 0.0
        %1056 = vmatpush1.msra.mxu0 0.0
        %1057 = vmatprep.mubr.f32.mxu0 0.0
        %1058 = vmatmul.mubr.f32.gmra.mrb[0].mxu0 %v982
        %v1059 = vpop.f32.mrb[0].mxu0
        %v1060 = vadd.f32 0.0, %v1059
        %v1061 = vpop.f32.mrb[0].mxu0
        %1062 = vmatprep.mubr.f32.mxu0 0.0
        %1063 = vmatmul.mubr.f32.gmra.mrb[0].mxu0 %v985
        %v1064 = vpop.f32.mrb[0].mxu0
        %v1065 = vadd.f32 0.0, %v1064
        %v1066 = vpop.f32.mrb[0].mxu0
        %1067 = vmatprep.mubr.f32.mxu0 0.0
        %1068 = vmatmul.mubr.f32.gmra.mrb[0].mxu0 %v988
        %v1069 = vpop.f32.mrb[0].mxu0
        %v1070 = vadd.f32 0.0, %v1069
        %v1071 = vpop.f32.mrb[0].mxu0
        %1072 = vdwg.mxu0
        %vm1075 = vcmask 1042432
        %v1076 = vrot.slane %v1060, 5
        %v1077 = vrot.slane %v1065, 5
        %v1078 = vsel %vm1075, %v1076, %v1077
        %1079 = vrot.lane.b32.xlu0 %v1078, 8
        %v1080 = vpop.permute.xlu0 %1079
        %v1082 = vrot.slane %v1065, 2
        %1083 = vrot.lane.b32.xlu0 %v1082, 16
        %v1084 = vpop.permute.xlu0 %1083
        %vm1087 = vcmask 1040384
        %v1088 = vrot.slane %v1065, 7
        %v1089 = vrot.slane %v1070, 7
        %v1090 = vsel %vm1087, %v1088, %v1089
        %1091 = vrot.lane.b32.xlu0 %v1090, 24
        %v1092 = vpop.permute.xlu0 %1091
        %v1094 = vsel %vm839, %v1060, %v1080
        %vm1095 = vcmask 130048
        %v1096 = vsel %vm1095, %v1094, %v1084
        %vm1097 = vcmask 195584
        %v1098 = vsel %vm1097, %v1096, %v1092
        %v1099 = vld [vmem:[%s7] sm:$0xff]
        %v1100 = vld [vmem:[%s7 + $0x8] sm:$0xff]
        %v1101 = vld [vmem:[%s7 + $0x10] sm:$0xff]
        %v1102 = vld [vmem:[%s7 + $0x18] sm:$0xff]
        %v1104 = vsel %vm738, %v1098, 0
        %1106 = vmatprep.subr.mxu0 0.0
        %1107 = vmatpush1.msra.mxu0 %v1099
        %1108 = vmatprep.subr.mxu0 0.0
        %1109 = vmatpush1.msra.mxu0 %v1100
        %1110 = vmatprep.subr.mxu0 0.0
        %1111 = vmatpush1.msra.mxu0 %v1101
        %1112 = vmatprep.subr.mxu0 0.0
        %1113 = vmatpush1.msra.mxu0 %v1102
        %1114 = vmatprep.subr.mxu0 0.0
        %1115 = vmatpush1.msra.mxu0 0.0
        %1116 = vmatprep.subr.mxu0 0.0
        %1117 = vmatpush1.msra.mxu0 0.0
        %1118 = vmatprep.subr.mxu0 0.0
        %1119 = vmatpush1.msra.mxu0 0.0
        %1120 = vmatprep.subr.mxu0 0.0
        %1121 = vmatpush1.msra.mxu0 0.0
        %1122 = vmatprep.subr.mxu0 0.0
        %1123 = vmatpush1.msra.mxu0 0.0
        %1124 = vmatprep.subr.mxu0 0.0
        %1125 = vmatpush1.msra.mxu0 0.0
        %1126 = vmatprep.subr.mxu0 0.0
        %1127 = vmatpush1.msra.mxu0 0.0
        %1128 = vmatprep.subr.mxu0 0.0
        %1129 = vmatpush1.msra.mxu0 0.0
        %1130 = vmatprep.subr.mxu0 0.0
        %1131 = vmatpush1.msra.mxu0 0.0
        %1132 = vmatprep.subr.mxu0 0.0
        %1133 = vmatpush1.msra.mxu0 0.0
        %1134 = vmatprep.subr.mxu0 0.0
        %1135 = vmatpush1.msra.mxu0 0.0
        %1136 = vmatprep.subr.mxu0 0.0
        %1137 = vmatpush1.msra.mxu0 0.0
        %1138 = vmatprep.subr.mxu0 0.0
        %1139 = vmatpush1.msra.mxu0 0.0
        %1140 = vmatprep.subr.mxu0 0.0
        %1141 = vmatpush1.msra.mxu0 0.0
        %1142 = vmatprep.subr.mxu0 0.0
        %1143 = vmatpush1.msra.mxu0 0.0
        %1144 = vmatprep.subr.mxu0 0.0
        %1145 = vmatpush1.msra.mxu0 0.0
        %1146 = vmatprep.subr.mxu0 0.0
        %1147 = vmatpush1.msra.mxu0 0.0
        %1148 = vmatprep.subr.mxu0 0.0
        %1149 = vmatpush1.msra.mxu0 0.0
        %1150 = vmatprep.subr.mxu0 0.0
        %1151 = vmatpush1.msra.mxu0 0.0
        %1152 = vmatprep.subr.mxu0 0.0
        %1153 = vmatpush1.msra.mxu0 0.0
        %1154 = vmatprep.subr.mxu0 0.0
        %1155 = vmatpush1.msra.mxu0 0.0
        %1156 = vmatprep.subr.mxu0 0.0
        %1157 = vmatpush1.msra.mxu0 0.0
        %1158 = vmatprep.subr.mxu0 0.0
        %1159 = vmatpush1.msra.mxu0 0.0
        %1160 = vmatprep.subr.mxu0 0.0
        %1161 = vmatpush1.msra.mxu0 0.0
        %1162 = vmatprep.subr.mxu0 0.0
        %1163 = vmatpush1.msra.mxu0 0.0
        %1164 = vmatprep.subr.mxu0 0.0
        %1165 = vmatpush1.msra.mxu0 0.0
        %1166 = vmatprep.subr.mxu0 0.0
        %1167 = vmatpush1.msra.mxu0 0.0
        %1168 = vmatprep.subr.mxu0 0.0
        %1169 = vmatpush1.msra.mxu0 0.0
        %1170 = vmatprep.mubr.f32.mxu0 0.0
        %1171 = vmatmul.mubr.f32.gmra.mrb[0].mxu0 %v1104
        %v1172 = vpop.f32.mrb[0].mxu0
        %v1173 = vadd.f32 0.0, %v1172
        %v1174 = vpop.f32.mrb[0].mxu0
        %1175 = vdwg.mxu0
        %v1176 = vadd.f32 %v694, %v1173
        %v1177 = vld [vmem:[%s2 + $0x7] sm:$0x1]
        %v1178 = vlaneseq
        %v1179 = vshrl.u32 %v1178, 7
        %v1180 = vsub.s32 0, %v1179
        %v1181 = vrot.slane %v1177, %v1180
        %v1182 = vadd.f32 %v1176, %v1181
        %v1183 = vld [vmem:[%s2 + $0x8] sm:$0x1]
        %v1184 = vld [vmem:[%s2 + $0x9] sm:$0x1]
        %v1185 = vsel %vm702, %v1182, 0.0
        %1186 = vadd.xlane.f32.xlu0 %v1185
        %v1187 = vpop.xlane.xlu0 %1186
        %v1188 = vmul.f32 %v1187, %v706
        %v1189 = vsub.f32 %v1182, %v1188
        %v1190 = vmul.f32 %v1189, %v1189
        %v1191 = vsel %vm702, %v1190, 0.0
        %1192 = vadd.xlane.f32.xlu0 %v1191
        %v1193 = vpop.xlane.xlu0 %1192
        %v1194 = vmul.f32 %v1193, %v706
        %v1195 = vadd.f32 %v1194, 1e-06
        %v1196 = vrsqrt.pop %v1195
        %v1197 = vmul.f32 %v1189, %v1196
        %v1198 = vlaneseq
        %v1199 = vshrl.u32 %v1198, 7
        %v1200 = vsub.s32 0, %v1199
        %v1201 = vrot.slane %v1183, %v1200
        %v1202 = vmul.f32 %v1197, %v1201
        %v1203 = vlaneseq
        %v1204 = vshrl.u32 %v1203, 7
        %v1205 = vsub.s32 0, %v1204
        %v1206 = vrot.slane %v1184, %v1205
        %v1207 = vadd.f32 %v1202, %v1206
        %v1208 = vld [vmem:[%s8] sm:$0xff]
        %v1209 = vld [vmem:[%s8 + $0x8] sm:$0xff]
        %v1210 = vld [vmem:[%s8 + $0x10] sm:$0xff]
        %v1211 = vld [vmem:[%s8 + $0x18] sm:$0xff]
        %v1212 = vld [vmem:[%s3] sm:$0x1]
        %v1213 = vlaneseq
        %v1214 = vshrl.u32 %v1213, 7
        %v1215 = vsub.s32 0, %v1214
        %v1216 = vrot.slane %v1212, %v1215
        %v1218 = vsel %vm738, %v1207, 0
        %1220 = vmatprep.subr.mxu0 0.0
        %1221 = vmatpush1.msra.mxu0 %v1208
        %1222 = vmatprep.subr.mxu0 0.0
        %1223 = vmatpush1.msra.mxu0 %v1209
        %1224 = vmatprep.subr.mxu0 0.0
        %1225 = vmatpush1.msra.mxu0 %v1210
        %1226 = vmatprep.subr.mxu0 0.0
        %1227 = vmatpush1.msra.mxu0 %v1211
        %1228 = vmatprep.subr.mxu0 0.0
        %1229 = vmatpush1.msra.mxu0 0.0
        %1230 = vmatprep.subr.mxu0 0.0
        %1231 = vmatpush1.msra.mxu0 0.0
        %1232 = vmatprep.subr.mxu0 0.0
        %1233 = vmatpush1.msra.mxu0 0.0
        %1234 = vmatprep.subr.mxu0 0.0
        %1235 = vmatpush1.msra.mxu0 0.0
        %1236 = vmatprep.subr.mxu0 0.0
        %1237 = vmatpush1.msra.mxu0 0.0
        %1238 = vmatprep.subr.mxu0 0.0
        %1239 = vmatpush1.msra.mxu0 0.0
        %1240 = vmatprep.subr.mxu0 0.0
        %1241 = vmatpush1.msra.mxu0 0.0
        %1242 = vmatprep.subr.mxu0 0.0
        %1243 = vmatpush1.msra.mxu0 0.0
        %1244 = vmatprep.subr.mxu0 0.0
        %1245 = vmatpush1.msra.mxu0 0.0
        %1246 = vmatprep.subr.mxu0 0.0
        %1247 = vmatpush1.msra.mxu0 0.0
        %1248 = vmatprep.subr.mxu0 0.0
        %1249 = vmatpush1.msra.mxu0 0.0
        %1250 = vmatprep.subr.mxu0 0.0
        %1251 = vmatpush1.msra.mxu0 0.0
        %1252 = vmatprep.subr.mxu0 0.0
        %1253 = vmatpush1.msra.mxu0 0.0
        %1254 = vmatprep.subr.mxu0 0.0
        %1255 = vmatpush1.msra.mxu0 0.0
        %1256 = vmatprep.subr.mxu0 0.0
        %1257 = vmatpush1.msra.mxu0 0.0
        %1258 = vmatprep.subr.mxu0 0.0
        %1259 = vmatpush1.msra.mxu0 0.0
        %1260 = vmatprep.subr.mxu0 0.0
        %1261 = vmatpush1.msra.mxu0 0.0
        %1262 = vmatprep.subr.mxu0 0.0
        %1263 = vmatpush1.msra.mxu0 0.0
        %1264 = vmatprep.subr.mxu0 0.0
        %1265 = vmatpush1.msra.mxu0 0.0
        %1266 = vmatprep.subr.mxu0 0.0
        %1267 = vmatpush1.msra.mxu0 0.0
        %1268 = vmatprep.subr.mxu0 0.0
        %1269 = vmatpush1.msra.mxu0 0.0
        %1270 = vmatprep.subr.mxu0 0.0
        %1271 = vmatpush1.msra.mxu0 0.0
        %1272 = vmatprep.subr.mxu0 0.0
        %1273 = vmatpush1.msra.mxu0 0.0
        %1274 = vmatprep.subr.mxu0 0.0
        %1275 = vmatpush1.msra.mxu0 0.0
        %1276 = vmatprep.subr.mxu0 0.0
        %1277 = vmatpush1.msra.mxu0 0.0
        %1278 = vmatprep.subr.mxu0 0.0
        %1279 = vmatpush1.msra.mxu0 0.0
        %1280 = vmatprep.subr.mxu0 0.0
        %1281 = vmatpush1.msra.mxu0 0.0
        %1282 = vmatprep.subr.mxu0 0.0
        %1283 = vmatpush1.msra.mxu0 0.0
        %1284 = vmatprep.mubr.f32.mxu0 0.0
        %1285 = vmatmul.mubr.f32.gmra.mrb[0].mxu0 %v1218
        %v1286 = vpop.f32.mrb[0].mxu0
        %v1287 = vadd.f32 %v1216, %v1286
        %v1288 = vpop.f32.mrb[0].mxu0
        %1289 = vdwg.mxu0
        %v1290 = vmul.f32 %v1287, 0.5
        %v1291 = vmul.f32 %v1287, 0.044715
        %v1292 = vmul.f32 %v1291, %v1287
        %v1293 = vmul.f32 %v1292, %v1287
        %v1294 = vadd.f32 %v1287, %v1293
        %v1295 = vmul.f32 %v1294, 0.7978846
        %v1296 = vtanh.pop %v1295
        %v1297 = vadd.f32 %v1296, 1.0
        %v1298 = vmul.f32 %v1290, %v1297
        %v1299 = vld [vmem:[%s9] sm:$0xff]
        %v1300 = vld [vmem:[%s9 + $0x8] sm:$0xff]
        %v1301 = vld [vmem:[%s9 + $0x10] sm:$0xff]
        %v1302 = vld [vmem:[%s9 + $0x18] sm:$0xff]
        %v1303 = vld [vmem:[%s9 + $0x20] sm:$0xff]
        %v1304 = vld [vmem:[%s9 + $0x28] sm:$0xff]
        %v1305 = vld [vmem:[%s9 + $0x30] sm:$0xff]
        %v1306 = vld [vmem:[%s9 + $0x38] sm:$0xff]
        %v1307 = vld [vmem:[%s9 + $0x40] sm:$0xff]
        %v1308 = vld [vmem:[%s9 + $0x48] sm:$0xff]
        %v1309 = vld [vmem:[%s9 + $0x50] sm:$0xff]
        %v1310 = vld [vmem:[%s9 + $0x58] sm:$0xff]
        %v1311 = vld [vmem:[%s9 + $0x60] sm:$0xff]
        %v1312 = vld [vmem:[%s9 + $0x68] sm:$0xff]
        %v1313 = vld [vmem:[%s9 + $0x70] sm:$0xff]
        %v1314 = vld [vmem:[%s9 + $0x78] sm:$0xff]
        %1315 = vmatprep.subr.mxu0 0.0
        %1316 = vmatpush1.msra.mxu0 %v1299
        %1317 = vmatprep.subr.mxu0 0.0
        %1318 = vmatpush1.msra.mxu0 %v1300
        %1319 = vmatprep.subr.mxu0 0.0
        %1320 = vmatpush1.msra.mxu0 %v1301
        %1321 = vmatprep.subr.mxu0 0.0
        %1322 = vmatpush1.msra.mxu0 %v1302
        %1323 = vmatprep.subr.mxu0 0.0
        %1324 = vmatpush1.msra.mxu0 %v1303
        %1325 = vmatprep.subr.mxu0 0.0
        %1326 = vmatpush1.msra.mxu0 %v1304
        %1327 = vmatprep.subr.mxu0 0.0
        %1328 = vmatpush1.msra.mxu0 %v1305
        %1329 = vmatprep.subr.mxu0 0.0
        %1330 = vmatpush1.msra.mxu0 %v1306
        %1331 = vmatprep.subr.mxu0 0.0
        %1332 = vmatpush1.msra.mxu0 %v1307
        %1333 = vmatprep.subr.mxu0 0.0
        %1334 = vmatpush1.msra.mxu0 %v1308
        %1335 = vmatprep.subr.mxu0 0.0
        %1336 = vmatpush1.msra.mxu0 %v1309
        %1337 = vmatprep.subr.mxu0 0.0
        %1338 = vmatpush1.msra.mxu0 %v1310
        %1339 = vmatprep.subr.mxu0 0.0
        %1340 = vmatpush1.msra.mxu0 %v1311
        %1341 = vmatprep.subr.mxu0 0.0
        %1342 = vmatpush1.msra.mxu0 %v1312
        %1343 = vmatprep.subr.mxu0 0.0
        %1344 = vmatpush1.msra.mxu0 %v1313
        %1345 = vmatprep.subr.mxu0 0.0
        %1346 = vmatpush1.msra.mxu0 %v1314
        %1347 = vmatprep.subr.mxu0 0.0
        %1348 = vmatpush1.msra.mxu0 0.0
        %1349 = vmatprep.subr.mxu0 0.0
        %1350 = vmatpush1.msra.mxu0 0.0
        %1351 = vmatprep.subr.mxu0 0.0
        %1352 = vmatpush1.msra.mxu0 0.0
        %1353 = vmatprep.subr.mxu0 0.0
        %1354 = vmatpush1.msra.mxu0 0.0
        %1355 = vmatprep.subr.mxu0 0.0
        %1356 = vmatpush1.msra.mxu0 0.0
        %1357 = vmatprep.subr.mxu0 0.0
        %1358 = vmatpush1.msra.mxu0 0.0
        %1359 = vmatprep.subr.mxu0 0.0
        %1360 = vmatpush1.msra.mxu0 0.0
        %1361 = vmatprep.subr.mxu0 0.0
        %1362 = vmatpush1.msra.mxu0 0.0
        %1363 = vmatprep.subr.mxu0 0.0
        %1364 = vmatpush1.msra.mxu0 0.0
        %1365 = vmatprep.subr.mxu0 0.0
        %1366 = vmatpush1.msra.mxu0 0.0
        %1367 = vmatprep.subr.mxu0 0.0
        %1368 = vmatpush1.msra.mxu0 0.0
        %1369 = vmatprep.subr.mxu0 0.0
        %1370 = vmatpush1.msra.mxu0 0.0
        %1371 = vmatprep.subr.mxu0 0.0
        %1372 = vmatpush1.msra.mxu0 0.0
        %1373 = vmatprep.subr.mxu0 0.0
        %1374 = vmatpush1.msra.mxu0 0.0
        %1375 = vmatprep.subr.mxu0 0.0
        %1376 = vmatpush1.msra.mxu0 0.0
        %1377 = vmatprep.subr.mxu0 0.0
        %1378 = vmatpush1.msra.mxu0 0.0
        %1379 = vmatprep.mubr.f32.mxu0 0.0
        %1380 = vmatmul.mubr.f32.gmra.mrb[0].mxu0 %v1298
        %v1381 = vpop.f32.mrb[0].mxu0
        %v1382 = vadd.f32 0.0, %v1381
        %v1383 = vpop.f32.mrb[0].mxu0
        %1384 = vdwg.mxu0
        %v1385 = vadd.f32 %v1182, %v1382
        %v1386 = vld [vmem:[%s2 + $0xa] sm:$0x1]
        %v1387 = vlaneseq
        %v1388 = vshrl.u32 %v1387, 7
        %v1389 = vsub.s32 0, %v1388
        %v1390 = vrot.slane %v1386, %v1389
        %v1391 = vadd.f32 %v1385, %v1390
        %v1392 = vld [vmem:[%s2 + $0xb] sm:$0x1]
        %v1393 = vld [vmem:[%s2 + $0xc] sm:$0x1]
        %v1394 = vsel %vm702, %v1391, 0.0
        %1395 = vadd.xlane.f32.xlu0 %v1394
        %v1396 = vpop.xlane.xlu0 %1395
        %v1397 = vmul.f32 %v1396, %v706
        %v1398 = vsub.f32 %v1391, %v1397
        %v1399 = vmul.f32 %v1398, %v1398
        %v1400 = vsel %vm702, %v1399, 0.0
        %1401 = vadd.xlane.f32.xlu0 %v1400
        %v1402 = vpop.xlane.xlu0 %1401
        %v1403 = vmul.f32 %v1402, %v706
        %v1404 = vadd.f32 %v1403, 1e-06
        %v1405 = vrsqrt.pop %v1404
        %v1406 = vmul.f32 %v1398, %v1405
        %v1407 = vlaneseq
        %v1408 = vshrl.u32 %v1407, 7
        %v1409 = vsub.s32 0, %v1408
        %v1410 = vrot.slane %v1392, %v1409
        %v1411 = vmul.f32 %v1406, %v1410
        %v1412 = vlaneseq
        %v1413 = vshrl.u32 %v1412, 7
        %v1414 = vsub.s32 0, %v1413
        %v1415 = vrot.slane %v1393, %v1414
        %v1416 = vadd.f32 %v1411, %v1415
        %s1417 = scalar_lea.vmem %s4, 32
        %v1418 = vld [vmem:[%s1417] sm:$0xff]
        %v1419 = vld [vmem:[%s1417 + $0x8] sm:$0xff]
        %v1420 = vld [vmem:[%s1417 + $0x10] sm:$0xff]
        %v1421 = vld [vmem:[%s1417 + $0x18] sm:$0xff]
        %s1422 = scalar_lea.vmem %s5, 1
        %v1423 = vld [vmem:[%s1422] sm:$0x1]
        %v1425 = vlaneseq
        %v1426 = vshrl.u32 %v1425, 7
        %v1427 = vsub.s32 0, %v1426
        %v1428 = vrot.slane %v1423, %v1427
        %v1431 = vsel %vm738, %v1416, 0
        %1433 = vmatprep.subr.mxu0 0.0
        %1434 = vmatpush1.msra.mxu0 %v1418
        %1435 = vmatprep.subr.mxu0 0.0
        %1436 = vmatpush1.msra.mxu0 %v1419
        %1437 = vmatprep.subr.mxu0 0.0
        %1438 = vmatpush1.msra.mxu0 %v1420
        %1439 = vmatprep.subr.mxu0 0.0
        %1440 = vmatpush1.msra.mxu0 %v1421
        %1441 = vmatprep.subr.mxu0 0.0
        %1442 = vmatpush1.msra.mxu0 0.0
        %1443 = vmatprep.subr.mxu0 0.0
        %1444 = vmatpush1.msra.mxu0 0.0
        %1445 = vmatprep.subr.mxu0 0.0
        %1446 = vmatpush1.msra.mxu0 0.0
        %1447 = vmatprep.subr.mxu0 0.0
        %1448 = vmatpush1.msra.mxu0 0.0
        %1449 = vmatprep.subr.mxu0 0.0
        %1450 = vmatpush1.msra.mxu0 0.0
        %1451 = vmatprep.subr.mxu0 0.0
        %1452 = vmatpush1.msra.mxu0 0.0
        %1453 = vmatprep.subr.mxu0 0.0
        %1454 = vmatpush1.msra.mxu0 0.0
        %1455 = vmatprep.subr.mxu0 0.0
        %1456 = vmatpush1.msra.mxu0 0.0
        %1457 = vmatprep.subr.mxu0 0.0
        %1458 = vmatpush1.msra.mxu0 0.0
        %1459 = vmatprep.subr.mxu0 0.0
        %1460 = vmatpush1.msra.mxu0 0.0
        %1461 = vmatprep.subr.mxu0 0.0
        %1462 = vmatpush1.msra.mxu0 0.0
        %1463 = vmatprep.subr.mxu0 0.0
        %1464 = vmatpush1.msra.mxu0 0.0
        %1465 = vmatprep.subr.mxu0 0.0
        %1466 = vmatpush1.msra.mxu0 0.0
        %1467 = vmatprep.subr.mxu0 0.0
        %1468 = vmatpush1.msra.mxu0 0.0
        %1469 = vmatprep.subr.mxu0 0.0
        %1470 = vmatpush1.msra.mxu0 0.0
        %1471 = vmatprep.subr.mxu0 0.0
        %1472 = vmatpush1.msra.mxu0 0.0
        %1473 = vmatprep.subr.mxu0 0.0
        %1474 = vmatpush1.msra.mxu0 0.0
        %1475 = vmatprep.subr.mxu0 0.0
        %1476 = vmatpush1.msra.mxu0 0.0
        %1477 = vmatprep.subr.mxu0 0.0
        %1478 = vmatpush1.msra.mxu0 0.0
        %1479 = vmatprep.subr.mxu0 0.0
        %1480 = vmatpush1.msra.mxu0 0.0
        %1481 = vmatprep.subr.mxu0 0.0
        %1482 = vmatpush1.msra.mxu0 0.0
        %1483 = vmatprep.subr.mxu0 0.0
        %1484 = vmatpush1.msra.mxu0 0.0
        %1485 = vmatprep.subr.mxu0 0.0
        %1486 = vmatpush1.msra.mxu0 0.0
        %1487 = vmatprep.subr.mxu0 0.0
        %1488 = vmatpush1.msra.mxu0 0.0
        %1489 = vmatprep.subr.mxu0 0.0
        %1490 = vmatpush1.msra.mxu0 0.0
        %1491 = vmatprep.subr.mxu0 0.0
        %1492 = vmatpush1.msra.mxu0 0.0
        %1493 = vmatprep.subr.mxu0 0.0
        %1494 = vmatpush1.msra.mxu0 0.0
        %1495 = vmatprep.subr.mxu0 0.0
        %1496 = vmatpush1.msra.mxu0 0.0
        %1497 = vmatprep.mubr.f32.mxu0 0.0
        %1498 = vmatmul.mubr.f32.gmra.mrb[0].mxu0 %v1431
        %v1499 = vpop.f32.mrb[0].mxu0
        %v1500 = vadd.f32 %v1428, %v1499
        %v1501 = vpop.f32.mrb[0].mxu0
        %1502 = vdwg.mxu0
        %v1504 = vrot.slane %v1500, 3
        %1505 = vrot.lane.b32.xlu0 %v1504, 104
        %v1506 = vpop.permute.xlu0 %1505
        %v1508 = vrot.slane %v1500, 6
        %1509 = vrot.lane.b32.xlu0 %v1508, 80
        %v1510 = vpop.permute.xlu0 %1509
        %v1512 = vrot.slane %v1500, 1
        %1513 = vrot.lane.b32.xlu0 %v1512, 56
        %v1514 = vpop.permute.xlu0 %1513
        %v1516 = vsel %vm825, %v1500, %v1506
        %v1517 = vsel %vm827, %v1506, %v1510
        %v1518 = vsel %vm829, %v1517, %v1514
        %1521 = vrot.lane.b32.xlu0 %v1516, 120
        %v1522 = vpop.permute.xlu0 %1521
        %1523 = vrot.lane.b32.xlu0 %v1518, 120
        %v1524 = vpop.permute.xlu0 %1523
        %1525 = vrot.lane.b32.xlu0 %v1514, 120
        %v1526 = vpop.permute.xlu0 %1525
        %v1527 = vsel %vm839, %v1516, 0
        %v1529 = vsel %vm839, %v1518, 0
        %v1531 = vsel %vm839, %v1514, 0
        %v1533 = vsel %vm839, %v1522, 0
        %v1535 = vsel %vm839, %v1524, 0
        %v1537 = vsel %vm839, %v1526, 0
        %1539 = vmatprep.subr.mxu0 0.0
        %1540 = vmatpush1.xpose.msra.mxu0 %v1533
        %1541 = vmatprep.subr.mxu0 0.0
        %1542 = vmatpush1.xpose.msra.mxu0 %v1535
        %1543 = vmatprep.subr.mxu0 0.0
        %1544 = vmatpush1.xpose.msra.mxu0 %v1537
        %1545 = vmatprep.subr.mxu0 0.0
        %1546 = vmatpush1.xpose.msra.mxu0 0.0
        %1547 = vmatprep.subr.mxu0 0.0
        %1548 = vmatpush1.xpose.msra.mxu0 0.0
        %1549 = vmatprep.subr.mxu0 0.0
        %1550 = vmatpush1.xpose.msra.mxu0 0.0
        %1551 = vmatprep.subr.mxu0 0.0
        %1552 = vmatpush1.xpose.msra.mxu0 0.0
        %1553 = vmatprep.subr.mxu0 0.0
        %1554 = vmatpush1.xpose.msra.mxu0 0.0
        %1555 = vmatprep.subr.mxu0 0.0
        %1556 = vmatpush1.xpose.msra.mxu0 0.0
        %1557 = vmatprep.subr.mxu0 0.0
        %1558 = vmatpush1.xpose.msra.mxu0 0.0
        %1559 = vmatprep.subr.mxu0 0.0
        %1560 = vmatpush1.xpose.msra.mxu0 0.0
        %1561 = vmatprep.subr.mxu0 0.0
        %1562 = vmatpush1.xpose.msra.mxu0 0.0
        %1563 = vmatprep.subr.mxu0 0.0
        %1564 = vmatpush1.xpose.msra.mxu0 0.0
        %1565 = vmatprep.subr.mxu0 0.0
        %1566 = vmatpush1.xpose.msra.mxu0 0.0
        %1567 = vmatprep.subr.mxu0 0.0
        %1568 = vmatpush1.xpose.msra.mxu0 0.0
        %1569 = vmatprep.subr.mxu0 0.0
        %1570 = vmatpush1.xpose.msra.mxu0 0.0
        %1571 = vmatprep.subr.mxu0 0.0
        %1572 = vmatpush1.xpose.msra.mxu0 0.0
        %1573 = vmatprep.subr.mxu0 0.0
        %1574 = vmatpush1.xpose.msra.mxu0 0.0
        %1575 = vmatprep.subr.mxu0 0.0
        %1576 = vmatpush1.xpose.msra.mxu0 0.0
        %1577 = vmatprep.subr.mxu0 0.0
        %1578 = vmatpush1.xpose.msra.mxu0 0.0
        %1579 = vmatprep.subr.mxu0 0.0
        %1580 = vmatpush1.xpose.msra.mxu0 0.0
        %1581 = vmatprep.subr.mxu0 0.0
        %1582 = vmatpush1.xpose.msra.mxu0 0.0
        %1583 = vmatprep.subr.mxu0 0.0
        %1584 = vmatpush1.xpose.msra.mxu0 0.0
        %1585 = vmatprep.subr.mxu0 0.0
        %1586 = vmatpush1.xpose.msra.mxu0 0.0
        %1587 = vmatprep.subr.mxu0 0.0
        %1588 = vmatpush1.xpose.msra.mxu0 0.0
        %1589 = vmatprep.subr.mxu0 0.0
        %1590 = vmatpush1.xpose.msra.mxu0 0.0
        %1591 = vmatprep.subr.mxu0 0.0
        %1592 = vmatpush1.xpose.msra.mxu0 0.0
        %1593 = vmatprep.subr.mxu0 0.0
        %1594 = vmatpush1.xpose.msra.mxu0 0.0
        %1595 = vmatprep.subr.mxu0 0.0
        %1596 = vmatpush1.xpose.msra.mxu0 0.0
        %1597 = vmatprep.subr.mxu0 0.0
        %1598 = vmatpush1.xpose.msra.mxu0 0.0
        %1599 = vmatprep.subr.mxu0 0.0
        %1600 = vmatpush1.xpose.msra.mxu0 0.0
        %1601 = vmatprep.subr.mxu0 0.0
        %1602 = vmatpush1.xpose.msra.mxu0 0.0
        %1603 = vmatprep.mubr.f32.mxu0 0.0
        %1604 = vmatmul.mubr.f32.gmra.mrb[0].mxu0 %v1527
        %v1605 = vpop.f32.mrb[0].mxu0
        %v1606 = vadd.f32 0.0, %v1605
        %v1607 = vpop.f32.mrb[0].mxu0
        %1608 = vmatprep.mubr.f32.mxu0 0.0
        %1609 = vmatmul.mubr.f32.gmra.mrb[0].mxu0 %v1529
        %v1610 = vpop.f32.mrb[0].mxu0
        %v1611 = vadd.f32 0.0, %v1610
        %v1612 = vpop.f32.mrb[0].mxu0
        %1613 = vmatprep.mubr.f32.mxu0 0.0
        %1614 = vmatmul.mubr.f32.gmra.mrb[0].mxu0 %v1531
        %v1615 = vpop.f32.mrb[0].mxu0
        %v1616 = vadd.f32 0.0, %v1615
        %v1617 = vpop.f32.mrb[0].mxu0
        %1618 = vdwg.mxu0
        %v1619 = vmul.f32 %v1606, 0.35355338
        %v1620 = vmul.f32 %v1611, 0.35355338
        %v1621 = vmul.f32 %v1616, 0.35355338
        %v1622 = vadd.f32 %v1619, %v697
        %v1623 = vadd.f32 %v1620, %v698
        %v1624 = vadd.f32 %v1621, %v699
        %v1625 = vsel %vm938, %v1622, -inf
        %1626 = vmax.xlane.f32.xlu0 %v1625
        %v1627 = vpop.xlane.xlu0 %1626
        %v1628 = vsel %vm938, %v1623, -inf
        %1629 = vmax.xlane.f32.xlu0 %v1628
        %v1630 = vpop.xlane.xlu0 %1629
        %v1631 = vsel %vm945, %v1624, -inf
        %1632 = vmax.xlane.f32.xlu0 %v1631
        %v1633 = vpop.xlane.xlu0 %1632
        %v1634 = vsub.f32 %v1622, %v1627
        %v1635 = vsub.f32 %v1623, %v1630
        %v1636 = vsub.f32 %v1624, %v1633
        %v1637 = vmul.f32 %v1634, 1.442695
        %v1638 = vpow.pop %v1637
        %v1639 = vmul.f32 %v1635, 1.442695
        %v1640 = vpow.pop %v1639
        %v1641 = vmul.f32 %v1636, 1.442695
        %v1642 = vpow.pop %v1641
        %v1643 = vsel %vm938, %v1638, 0.0
        %1644 = vadd.xlane.f32.xlu0 %v1643
        %v1645 = vpop.xlane.xlu0 %1644
        %v1646 = vsel %vm938, %v1640, 0.0
        %1647 = vadd.xlane.f32.xlu0 %v1646
        %v1648 = vpop.xlane.xlu0 %1647
        %v1649 = vsel %vm945, %v1642, 0.0
        %1650 = vadd.xlane.f32.xlu0 %v1649
        %v1651 = vpop.xlane.xlu0 %1650
        %v1652 = vrcp.pop %v1645
        %v1653 = vrcp.pop %v1648
        %v1654 = vrcp.pop %v1651
        %v1655 = vmul.f32 %v1638, %v1652
        %v1656 = vmul.f32 %v1640, %v1653
        %v1657 = vmul.f32 %v1642, %v1654
        %1658 = vrot.lane.b32.xlu0 %v1516, 112
        %v1659 = vpop.permute.xlu0 %1658
        %1660 = vrot.lane.b32.xlu0 %v1518, 112
        %v1661 = vpop.permute.xlu0 %1660
        %1662 = vrot.lane.b32.xlu0 %v1514, 112
        %v1663 = vpop.permute.xlu0 %1662
        %v1667 = vsel %vm938, %v1655, 0
        %v1670 = vsel %vm938, %v1656, 0
        %v1673 = vsel %vm938, %v1657, 0
        %v1675 = vsel %vm990, %v1663, 0
        %1677 = vmatprep.subr.mxu0 0.0
        %1678 = vmatpush1.msra.mxu0 %v1659
        %1679 = vmatprep.subr.mxu0 0.0
        %1680 = vmatpush1.msra.mxu0 %v1661
        %1681 = vmatprep.subr.mxu0 0.0
        %1682 = vmatpush1.msra.mxu0 %v1675
        %1683 = vmatprep.subr.mxu0 0.0
        %1684 = vmatpush1.msra.mxu0 0.0
        %1685 = vmatprep.subr.mxu0 0.0
        %1686 = vmatpush1.msra.mxu0 0.0
        %1687 = vmatprep.subr.mxu0 0.0
        %1688 = vmatpush1.msra.mxu0 0.0
        %1689 = vmatprep.subr.mxu0 0.0
        %1690 = vmatpush1.msra.mxu0 0.0
        %1691 = vmatprep.subr.mxu0 0.0
        %1692 = vmatpush1.msra.mxu0 0.0
        %1693 = vmatprep.subr.mxu0 0.0
        %1694 = vmatpush1.msra.mxu0 0.0
        %1695 = vmatprep.subr.mxu0 0.0
        %1696 = vmatpush1.msra.mxu0 0.0
        %1697 = vmatprep.subr.mxu0 0.0
        %1698 = vmatpush1.msra.mxu0 0.0
        %1699 = vmatprep.subr.mxu0 0.0
        %1700 = vmatpush1.msra.mxu0 0.0
        %1701 = vmatprep.subr.mxu0 0.0
        %1702 = vmatpush1.msra.mxu0 0.0
        %1703 = vmatprep.subr.mxu0 0.0
        %1704 = vmatpush1.msra.mxu0 0.0
        %1705 = vmatprep.subr.mxu0 0.0
        %1706 = vmatpush1.msra.mxu0 0.0
        %1707 = vmatprep.subr.mxu0 0.0
        %1708 = vmatpush1.msra.mxu0 0.0
        %1709 = vmatprep.subr.mxu0 0.0
        %1710 = vmatpush1.msra.mxu0 0.0
        %1711 = vmatprep.subr.mxu0 0.0
        %1712 = vmatpush1.msra.mxu0 0.0
        %1713 = vmatprep.subr.mxu0 0.0
        %1714 = vmatpush1.msra.mxu0 0.0
        %1715 = vmatprep.subr.mxu0 0.0
        %1716 = vmatpush1.msra.mxu0 0.0
        %1717 = vmatprep.subr.mxu0 0.0
        %1718 = vmatpush1.msra.mxu0 0.0
        %1719 = vmatprep.subr.mxu0 0.0
        %1720 = vmatpush1.msra.mxu0 0.0
        %1721 = vmatprep.subr.mxu0 0.0
        %1722 = vmatpush1.msra.mxu0 0.0
        %1723 = vmatprep.subr.mxu0 0.0
        %1724 = vmatpush1.msra.mxu0 0.0
        %1725 = vmatprep.subr.mxu0 0.0
        %1726 = vmatpush1.msra.mxu0 0.0
        %1727 = vmatprep.subr.mxu0 0.0
        %1728 = vmatpush1.msra.mxu0 0.0
        %1729 = vmatprep.subr.mxu0 0.0
        %1730 = vmatpush1.msra.mxu0 0.0
        %1731 = vmatprep.subr.mxu0 0.0
        %1732 = vmatpush1.msra.mxu0 0.0
        %1733 = vmatprep.subr.mxu0 0.0
        %1734 = vmatpush1.msra.mxu0 0.0
        %1735 = vmatprep.subr.mxu0 0.0
        %1736 = vmatpush1.msra.mxu0 0.0
        %1737 = vmatprep.subr.mxu0 0.0
        %1738 = vmatpush1.msra.mxu0 0.0
        %1739 = vmatprep.subr.mxu0 0.0
        %1740 = vmatpush1.msra.mxu0 0.0
        %1741 = vmatprep.mubr.f32.mxu0 0.0
        %1742 = vmatmul.mubr.f32.gmra.mrb[0].mxu0 %v1667
        %v1743 = vpop.f32.mrb[0].mxu0
        %v1744 = vadd.f32 0.0, %v1743
        %v1745 = vpop.f32.mrb[0].mxu0
        %1746 = vmatprep.mubr.f32.mxu0 0.0
        %1747 = vmatmul.mubr.f32.gmra.mrb[0].mxu0 %v1670
        %v1748 = vpop.f32.mrb[0].mxu0
        %v1749 = vadd.f32 0.0, %v1748
        %v1750 = vpop.f32.mrb[0].mxu0
        %1751 = vmatprep.mubr.f32.mxu0 0.0
        %1752 = vmatmul.mubr.f32.gmra.mrb[0].mxu0 %v1673
        %v1753 = vpop.f32.mrb[0].mxu0
        %v1754 = vadd.f32 0.0, %v1753
        %v1755 = vpop.f32.mrb[0].mxu0
        %1756 = vdwg.mxu0
        %v1759 = vrot.slane %v1744, 5
        %v1760 = vrot.slane %v1749, 5
        %v1761 = vsel %vm1075, %v1759, %v1760
        %1762 = vrot.lane.b32.xlu0 %v1761, 8
        %v1763 = vpop.permute.xlu0 %1762
        %v1765 = vrot.slane %v1749, 2
        %1766 = vrot.lane.b32.xlu0 %v1765, 16
        %v1767 = vpop.permute.xlu0 %1766
        %v1770 = vrot.slane %v1749, 7
        %v1771 = vrot.slane %v1754, 7
        %v1772 = vsel %vm1087, %v1770, %v1771
        %1773 = vrot.lane.b32.xlu0 %v1772, 24
        %v1774 = vpop.permute.xlu0 %1773
        %v1776 = vsel %vm839, %v1744, %v1763
        %v1777 = vsel %vm1095, %v1776, %v1767
        %v1778 = vsel %vm1097, %v1777, %v1774
        %s1779 = scalar_lea.vmem %s7, 32
        %v1780 = vld [vmem:[%s1779] sm:$0xff]
        %v1781 = vld [vmem:[%s1779 + $0x8] sm:$0xff]
        %v1782 = vld [vmem:[%s1779 + $0x10] sm:$0xff]
        %v1783 = vld [vmem:[%s1779 + $0x18] sm:$0xff]
        %v1785 = vsel %vm738, %v1778, 0
        %1787 = vmatprep.subr.mxu0 0.0
        %1788 = vmatpush1.msra.mxu0 %v1780
        %1789 = vmatprep.subr.mxu0 0.0
        %1790 = vmatpush1.msra.mxu0 %v1781
        %1791 = vmatprep.subr.mxu0 0.0
        %1792 = vmatpush1.msra.mxu0 %v1782
        %1793 = vmatprep.subr.mxu0 0.0
        %1794 = vmatpush1.msra.mxu0 %v1783
        %1795 = vmatprep.subr.mxu0 0.0
        %1796 = vmatpush1.msra.mxu0 0.0
        %1797 = vmatprep.subr.mxu0 0.0
        %1798 = vmatpush1.msra.mxu0 0.0
        %1799 = vmatprep.subr.mxu0 0.0
        %1800 = vmatpush1.msra.mxu0 0.0
        %1801 = vmatprep.subr.mxu0 0.0
        %1802 = vmatpush1.msra.mxu0 0.0
        %1803 = vmatprep.subr.mxu0 0.0
        %1804 = vmatpush1.msra.mxu0 0.0
        %1805 = vmatprep.subr.mxu0 0.0
        %1806 = vmatpush1.msra.mxu0 0.0
        %1807 = vmatprep.subr.mxu0 0.0
        %1808 = vmatpush1.msra.mxu0 0.0
        %1809 = vmatprep.subr.mxu0 0.0
        %1810 = vmatpush1.msra.mxu0 0.0
        %1811 = vmatprep.subr.mxu0 0.0
        %1812 = vmatpush1.msra.mxu0 0.0
        %1813 = vmatprep.subr.mxu0 0.0
        %1814 = vmatpush1.msra.mxu0 0.0
        %1815 = vmatprep.subr.mxu0 0.0
        %1816 = vmatpush1.msra.mxu0 0.0
        %1817 = vmatprep.subr.mxu0 0.0
        %1818 = vmatpush1.msra.mxu0 0.0
        %1819 = vmatprep.subr.mxu0 0.0
        %1820 = vmatpush1.msra.mxu0 0.0
        %1821 = vmatprep.subr.mxu0 0.0
        %1822 = vmatpush1.msra.mxu0 0.0
        %1823 = vmatprep.subr.mxu0 0.0
        %1824 = vmatpush1.msra.mxu0 0.0
        %1825 = vmatprep.subr.mxu0 0.0
        %1826 = vmatpush1.msra.mxu0 0.0
        %1827 = vmatprep.subr.mxu0 0.0
        %1828 = vmatpush1.msra.mxu0 0.0
        %1829 = vmatprep.subr.mxu0 0.0
        %1830 = vmatpush1.msra.mxu0 0.0
        %1831 = vmatprep.subr.mxu0 0.0
        %1832 = vmatpush1.msra.mxu0 0.0
        %1833 = vmatprep.subr.mxu0 0.0
        %1834 = vmatpush1.msra.mxu0 0.0
        %1835 = vmatprep.subr.mxu0 0.0
        %1836 = vmatpush1.msra.mxu0 0.0
        %1837 = vmatprep.subr.mxu0 0.0
        %1838 = vmatpush1.msra.mxu0 0.0
        %1839 = vmatprep.subr.mxu0 0.0
        %1840 = vmatpush1.msra.mxu0 0.0
        %1841 = vmatprep.subr.mxu0 0.0
        %1842 = vmatpush1.msra.mxu0 0.0
        %1843 = vmatprep.subr.mxu0 0.0
        %1844 = vmatpush1.msra.mxu0 0.0
        %1845 = vmatprep.subr.mxu0 0.0
        %1846 = vmatpush1.msra.mxu0 0.0
        %1847 = vmatprep.subr.mxu0 0.0
        %1848 = vmatpush1.msra.mxu0 0.0
        %1849 = vmatprep.subr.mxu0 0.0
        %1850 = vmatpush1.msra.mxu0 0.0
        %1851 = vmatprep.mubr.f32.mxu0 0.0
        %1852 = vmatmul.mubr.f32.gmra.mrb[0].mxu0 %v1785
        %v1853 = vpop.f32.mrb[0].mxu0
        %v1854 = vadd.f32 0.0, %v1853
        %v1855 = vpop.f32.mrb[0].mxu0
        %1856 = vdwg.mxu0
        %v1857 = vadd.f32 %v1391, %v1854
        %v1858 = vld [vmem:[%s2 + $0xd] sm:$0x1]
        %v1859 = vlaneseq
        %v1860 = vshrl.u32 %v1859, 7
        %v1861 = vsub.s32 0, %v1860
        %v1862 = vrot.slane %v1858, %v1861
        %v1863 = vadd.f32 %v1857, %v1862
        %v1864 = vld [vmem:[%s2 + $0xe] sm:$0x1]
        %v1865 = vld [vmem:[%s2 + $0xf] sm:$0x1]
        %v1866 = vsel %vm702, %v1863, 0.0
        %1867 = vadd.xlane.f32.xlu0 %v1866
        %v1868 = vpop.xlane.xlu0 %1867
        %v1869 = vmul.f32 %v1868, %v706
        %v1870 = vsub.f32 %v1863, %v1869
        %v1871 = vmul.f32 %v1870, %v1870
        %v1872 = vsel %vm702, %v1871, 0.0
        %1873 = vadd.xlane.f32.xlu0 %v1872
        %v1874 = vpop.xlane.xlu0 %1873
        %v1875 = vmul.f32 %v1874, %v706
        %v1876 = vadd.f32 %v1875, 1e-06
        %v1877 = vrsqrt.pop %v1876
        %v1878 = vmul.f32 %v1870, %v1877
        %v1879 = vlaneseq
        %v1880 = vshrl.u32 %v1879, 7
        %v1881 = vsub.s32 0, %v1880
        %v1882 = vrot.slane %v1864, %v1881
        %v1883 = vmul.f32 %v1878, %v1882
        %v1884 = vlaneseq
        %v1885 = vshrl.u32 %v1884, 7
        %v1886 = vsub.s32 0, %v1885
        %v1887 = vrot.slane %v1865, %v1886
        %v1888 = vadd.f32 %v1883, %v1887
        %s1889 = scalar_lea.vmem %s8, 32
        %v1890 = vld [vmem:[%s1889] sm:$0xff]
        %v1891 = vld [vmem:[%s1889 + $0x8] sm:$0xff]
        %v1892 = vld [vmem:[%s1889 + $0x10] sm:$0xff]
        %v1893 = vld [vmem:[%s1889 + $0x18] sm:$0xff]
        %v1894 = vld [vmem:[%s3 + $0x1] sm:$0x1]
        %v1895 = vlaneseq
        %v1896 = vshrl.u32 %v1895, 7
        %v1897 = vsub.s32 0, %v1896
        %v1898 = vrot.slane %v1894, %v1897
        %v1900 = vsel %vm738, %v1888, 0
        %1902 = vmatprep.subr.mxu0 0.0
        %1903 = vmatpush1.msra.mxu0 %v1890
        %1904 = vmatprep.subr.mxu0 0.0
        %1905 = vmatpush1.msra.mxu0 %v1891
        %1906 = vmatprep.subr.mxu0 0.0
        %1907 = vmatpush1.msra.mxu0 %v1892
        %1908 = vmatprep.subr.mxu0 0.0
        %1909 = vmatpush1.msra.mxu0 %v1893
        %1910 = vmatprep.subr.mxu0 0.0
        %1911 = vmatpush1.msra.mxu0 0.0
        %1912 = vmatprep.subr.mxu0 0.0
        %1913 = vmatpush1.msra.mxu0 0.0
        %1914 = vmatprep.subr.mxu0 0.0
        %1915 = vmatpush1.msra.mxu0 0.0
        %1916 = vmatprep.subr.mxu0 0.0
        %1917 = vmatpush1.msra.mxu0 0.0
        %1918 = vmatprep.subr.mxu0 0.0
        %1919 = vmatpush1.msra.mxu0 0.0
        %1920 = vmatprep.subr.mxu0 0.0
        %1921 = vmatpush1.msra.mxu0 0.0
        %1922 = vmatprep.subr.mxu0 0.0
        %1923 = vmatpush1.msra.mxu0 0.0
        %1924 = vmatprep.subr.mxu0 0.0
        %1925 = vmatpush1.msra.mxu0 0.0
        %1926 = vmatprep.subr.mxu0 0.0
        %1927 = vmatpush1.msra.mxu0 0.0
        %1928 = vmatprep.subr.mxu0 0.0
        %1929 = vmatpush1.msra.mxu0 0.0
        %1930 = vmatprep.subr.mxu0 0.0
        %1931 = vmatpush1.msra.mxu0 0.0
        %1932 = vmatprep.subr.mxu0 0.0
        %1933 = vmatpush1.msra.mxu0 0.0
        %1934 = vmatprep.subr.mxu0 0.0
        %1935 = vmatpush1.msra.mxu0 0.0
        %1936 = vmatprep.subr.mxu0 0.0
        %1937 = vmatpush1.msra.mxu0 0.0
        %1938 = vmatprep.subr.mxu0 0.0
        %1939 = vmatpush1.msra.mxu0 0.0
        %1940 = vmatprep.subr.mxu0 0.0
        %1941 = vmatpush1.msra.mxu0 0.0
        %1942 = vmatprep.subr.mxu0 0.0
        %1943 = vmatpush1.msra.mxu0 0.0
        %1944 = vmatprep.subr.mxu0 0.0
        %1945 = vmatpush1.msra.mxu0 0.0
        %1946 = vmatprep.subr.mxu0 0.0
        %1947 = vmatpush1.msra.mxu0 0.0
        %1948 = vmatprep.subr.mxu0 0.0
        %1949 = vmatpush1.msra.mxu0 0.0
        %1950 = vmatprep.subr.mxu0 0.0
        %1951 = vmatpush1.msra.mxu0 0.0
        %1952 = vmatprep.subr.mxu0 0.0
        %1953 = vmatpush1.msra.mxu0 0.0
        %1954 = vmatprep.subr.mxu0 0.0
        %1955 = vmatpush1.msra.mxu0 0.0
        %1956 = vmatprep.subr.mxu0 0.0
        %1957 = vmatpush1.msra.mxu0 0.0
        %1958 = vmatprep.subr.mxu0 0.0
        %1959 = vmatpush1.msra.mxu0 0.0
        %1960 = vmatprep.subr.mxu0 0.0
        %1961 = vmatpush1.msra.mxu0 0.0
        %1962 = vmatprep.subr.mxu0 0.0
        %1963 = vmatpush1.msra.mxu0 0.0
        %1964 = vmatprep.subr.mxu0 0.0
        %1965 = vmatpush1.msra.mxu0 0.0
        %1966 = vmatprep.mubr.f32.mxu0 0.0
        %1967 = vmatmul.mubr.f32.gmra.mrb[0].mxu0 %v1900
        %v1968 = vpop.f32.mrb[0].mxu0
        %v1969 = vadd.f32 %v1898, %v1968
        %v1970 = vpop.f32.mrb[0].mxu0
        %1971 = vdwg.mxu0
        %v1972 = vmul.f32 %v1969, 0.5
        %v1973 = vmul.f32 %v1969, 0.044715
        %v1974 = vmul.f32 %v1973, %v1969
        %v1975 = vmul.f32 %v1974, %v1969
        %v1976 = vadd.f32 %v1969, %v1975
        %v1977 = vmul.f32 %v1976, 0.7978846
        %v1978 = vtanh.pop %v1977
        %v1979 = vadd.f32 %v1978, 1.0
        %v1980 = vmul.f32 %v1972, %v1979
        %s1981 = scalar_lea.vmem %s9, 128
        %v1982 = vld [vmem:[%s1981] sm:$0xff]
        %v1983 = vld [vmem:[%s1981 + $0x8] sm:$0xff]
        %v1984 = vld [vmem:[%s1981 + $0x10] sm:$0xff]
        %v1985 = vld [vmem:[%s1981 + $0x18] sm:$0xff]
        %v1986 = vld [vmem:[%s1981 + $0x20] sm:$0xff]
        %v1987 = vld [vmem:[%s1981 + $0x28] sm:$0xff]
        %v1988 = vld [vmem:[%s1981 + $0x30] sm:$0xff]
        %v1989 = vld [vmem:[%s1981 + $0x38] sm:$0xff]
        %v1990 = vld [vmem:[%s1981 + $0x40] sm:$0xff]
        %v1991 = vld [vmem:[%s1981 + $0x48] sm:$0xff]
        %v1992 = vld [vmem:[%s1981 + $0x50] sm:$0xff]
        %v1993 = vld [vmem:[%s1981 + $0x58] sm:$0xff]
        %v1994 = vld [vmem:[%s1981 + $0x60] sm:$0xff]
        %v1995 = vld [vmem:[%s1981 + $0x68] sm:$0xff]
        %v1996 = vld [vmem:[%s1981 + $0x70] sm:$0xff]
        %v1997 = vld [vmem:[%s1981 + $0x78] sm:$0xff]
        %1998 = vmatprep.subr.mxu0 0.0
        %1999 = vmatpush1.msra.mxu0 %v1982
        %2000 = vmatprep.subr.mxu0 0.0
        %2001 = vmatpush1.msra.mxu0 %v1983
        %2002 = vmatprep.subr.mxu0 0.0
        %2003 = vmatpush1.msra.mxu0 %v1984
        %2004 = vmatprep.subr.mxu0 0.0
        %2005 = vmatpush1.msra.mxu0 %v1985
        %2006 = vmatprep.subr.mxu0 0.0
        %2007 = vmatpush1.msra.mxu0 %v1986
        %2008 = vmatprep.subr.mxu0 0.0
        %2009 = vmatpush1.msra.mxu0 %v1987
        %2010 = vmatprep.subr.mxu0 0.0
        %2011 = vmatpush1.msra.mxu0 %v1988
        %2012 = vmatprep.subr.mxu0 0.0
        %2013 = vmatpush1.msra.mxu0 %v1989
        %2014 = vmatprep.subr.mxu0 0.0
        %2015 = vmatpush1.msra.mxu0 %v1990
        %2016 = vmatprep.subr.mxu0 0.0
        %2017 = vmatpush1.msra.mxu0 %v1991
        %2018 = vmatprep.subr.mxu0 0.0
        %2019 = vmatpush1.msra.mxu0 %v1992
        %2020 = vmatprep.subr.mxu0 0.0
        %2021 = vmatpush1.msra.mxu0 %v1993
        %2022 = vmatprep.subr.mxu0 0.0
        %2023 = vmatpush1.msra.mxu0 %v1994
        %2024 = vmatprep.subr.mxu0 0.0
        %2025 = vmatpush1.msra.mxu0 %v1995
        %2026 = vmatprep.subr.mxu0 0.0
        %2027 = vmatpush1.msra.mxu0 %v1996
        %2028 = vmatprep.subr.mxu0 0.0
        %2029 = vmatpush1.msra.mxu0 %v1997
        %2030 = vmatprep.subr.mxu0 0.0
        %2031 = vmatpush1.msra.mxu0 0.0
        %2032 = vmatprep.subr.mxu0 0.0
        %2033 = vmatpush1.msra.mxu0 0.0
        %2034 = vmatprep.subr.mxu0 0.0
        %2035 = vmatpush1.msra.mxu0 0.0
        %2036 = vmatprep.subr.mxu0 0.0
        %2037 = vmatpush1.msra.mxu0 0.0
        %2038 = vmatprep.subr.mxu0 0.0
        %2039 = vmatpush1.msra.mxu0 0.0
        %2040 = vmatprep.subr.mxu0 0.0
        %2041 = vmatpush1.msra.mxu0 0.0
        %2042 = vmatprep.subr.mxu0 0.0
        %2043 = vmatpush1.msra.mxu0 0.0
        %2044 = vmatprep.subr.mxu0 0.0
        %2045 = vmatpush1.msra.mxu0 0.0
        %2046 = vmatprep.subr.mxu0 0.0
        %2047 = vmatpush1.msra.mxu0 0.0
        %2048 = vmatprep.subr.mxu0 0.0
        %2049 = vmatpush1.msra.mxu0 0.0
        %2050 = vmatprep.subr.mxu0 0.0
        %2051 = vmatpush1.msra.mxu0 0.0
        %2052 = vmatprep.subr.mxu0 0.0
        %2053 = vmatpush1.msra.mxu0 0.0
        %2054 = vmatprep.subr.mxu0 0.0
        %2055 = vmatpush1.msra.mxu0 0.0
        %2056 = vmatprep.subr.mxu0 0.0
        %2057 = vmatpush1.msra.mxu0 0.0
        %2058 = vmatprep.subr.mxu0 0.0
        %2059 = vmatpush1.msra.mxu0 0.0
        %2060 = vmatprep.subr.mxu0 0.0
        %2061 = vmatpush1.msra.mxu0 0.0
        %2062 = vmatprep.mubr.f32.mxu0 0.0
        %2063 = vmatmul.mubr.f32.gmra.mrb[0].mxu0 %v1980
        %v2064 = vpop.f32.mrb[0].mxu0
        %v2065 = vadd.f32 0.0, %v2064
        %v2066 = vpop.f32.mrb[0].mxu0
        %2067 = vdwg.mxu0
        %v2068 = vadd.f32 %v1863, %v2065
        %v2069 = vld [vmem:[%s2 + $0x10] sm:$0x1]
        %v2070 = vlaneseq
        %v2071 = vshrl.u32 %v2070, 7
        %v2072 = vsub.s32 0, %v2071
        %v2073 = vrot.slane %v2069, %v2072
        %v2074 = vadd.f32 %v2068, %v2073
        %v2075 = vld [vmem:[%s2 + $0x11] sm:$0x1]
        %v2076 = vld [vmem:[%s2 + $0x12] sm:$0x1]
        %vm2077 = vcmask 253952
        %v2078 = vsel %vm2077, %v2074, 0.0
        %2079 = vadd.xlane.f32.xlu0 %v2078
        %v2080 = vpop.xlane.xlu0 %2079
        %v2081 = vmul.f32 %v2080, %v706
        %v2082 = vsub.f32 %v2074, %v2081
        %v2083 = vmul.f32 %v2082, %v2082
        %v2084 = vsel %vm2077, %v2083, 0.0
        %2085 = vadd.xlane.f32.xlu0 %v2084
        %v2086 = vpop.xlane.xlu0 %2085
        %v2087 = vmul.f32 %v2086, %v706
        %v2088 = vadd.f32 %v2087, 1e-06
        %v2089 = vrsqrt.pop %v2088
        %v2090 = vmul.f32 %v2082, %v2089
        %v2091 = vmul.f32 %v2090, %v2075
        %v2092 = vadd.f32 %v2091, %v2076
        %v2093 = vld [vmem:[%s10] sm:$0xff]
        %v2094 = vld [vmem:[%s10 + $0x8] sm:$0xff]
        %v2095 = vld [vmem:[%s10 + $0x10] sm:$0xff]
        %v2096 = vld [vmem:[%s10 + $0x18] sm:$0xff]
        %v2097 = vld [vmem:[%s3 + $0x2] sm:$0x1]
        %v2099 = vsel %vm738, %v2092, 0
        %2101 = vmatprep.subr.mxu0 0.0
        %2102 = vmatpush1.msra.mxu0 %v2093
        %2103 = vmatprep.subr.mxu0 0.0
        %2104 = vmatpush1.msra.mxu0 %v2094
        %2105 = vmatprep.subr.mxu0 0.0
        %2106 = vmatpush1.msra.mxu0 %v2095
        %2107 = vmatprep.subr.mxu0 0.0
        %2108 = vmatpush1.msra.mxu0 %v2096
        %2109 = vmatprep.subr.mxu0 0.0
        %2110 = vmatpush1.msra.mxu0 0.0
        %2111 = vmatprep.subr.mxu0 0.0
        %2112 = vmatpush1.msra.mxu0 0.0
        %2113 = vmatprep.subr.mxu0 0.0
        %2114 = vmatpush1.msra.mxu0 0.0
        %2115 = vmatprep.subr.mxu0 0.0
        %2116 = vmatpush1.msra.mxu0 0.0
        %2117 = vmatprep.subr.mxu0 0.0
        %2118 = vmatpush1.msra.mxu0 0.0
        %2119 = vmatprep.subr.mxu0 0.0
        %2120 = vmatpush1.msra.mxu0 0.0
        %2121 = vmatprep.subr.mxu0 0.0
        %2122 = vmatpush1.msra.mxu0 0.0
        %2123 = vmatprep.subr.mxu0 0.0
        %2124 = vmatpush1.msra.mxu0 0.0
        %2125 = vmatprep.subr.mxu0 0.0
        %2126 = vmatpush1.msra.mxu0 0.0
        %2127 = vmatprep.subr.mxu0 0.0
        %2128 = vmatpush1.msra.mxu0 0.0
        %2129 = vmatprep.subr.mxu0 0.0
        %2130 = vmatpush1.msra.mxu0 0.0
        %2131 = vmatprep.subr.mxu0 0.0
        %2132 = vmatpush1.msra.mxu0 0.0
        %2133 = vmatprep.subr.mxu0 0.0
        %2134 = vmatpush1.msra.mxu0 0.0
        %2135 = vmatprep.subr.mxu0 0.0
        %2136 = vmatpush1.msra.mxu0 0.0
        %2137 = vmatprep.subr.mxu0 0.0
        %2138 = vmatpush1.msra.mxu0 0.0
        %2139 = vmatprep.subr.mxu0 0.0
        %2140 = vmatpush1.msra.mxu0 0.0
        %2141 = vmatprep.subr.mxu0 0.0
        %2142 = vmatpush1.msra.mxu0 0.0
        %2143 = vmatprep.subr.mxu0 0.0
        %2144 = vmatpush1.msra.mxu0 0.0
        %2145 = vmatprep.subr.mxu0 0.0
        %2146 = vmatpush1.msra.mxu0 0.0
        %2147 = vmatprep.subr.mxu0 0.0
        %2148 = vmatpush1.msra.mxu0 0.0
        %2149 = vmatprep.subr.mxu0 0.0
        %2150 = vmatpush1.msra.mxu0 0.0
        %2151 = vmatprep.subr.mxu0 0.0
        %2152 = vmatpush1.msra.mxu0 0.0
        %2153 = vmatprep.subr.mxu0 0.0
        %2154 = vmatpush1.msra.mxu0 0.0
        %2155 = vmatprep.subr.mxu0 0.0
        %2156 = vmatpush1.msra.mxu0 0.0
        %2157 = vmatprep.subr.mxu0 0.0
        %2158 = vmatpush1.msra.mxu0 0.0
        %2159 = vmatprep.subr.mxu0 0.0
        %2160 = vmatpush1.msra.mxu0 0.0
        %2161 = vmatprep.subr.mxu0 0.0
        %2162 = vmatpush1.msra.mxu0 0.0
        %2163 = vmatprep.subr.mxu0 0.0
        %2164 = vmatpush1.msra.mxu0 0.0
        %2165 = vmatprep.mubr.f32.mxu0 0.0
        %2166 = vmatmul.mubr.f32.gmra.mrb[0].mxu0 %v2099
        %v2167 = vpop.f32.mrb[0].mxu0
        %v2168 = vadd.f32 %v2097, %v2167
        %v2169 = vpop.f32.mrb[0].mxu0
        %2170 = vdwg.mxu0
        %2171 = vst [vmem:[%s378] sm:$0x1] %v2168
        %s2172 = sand.u32 %s269, 1
        %s2173 = scalar_lea.sflag [#allocation3], %s2172
        %s2174 = sand.u32 %s269, 1
        %s2175 = scalar_lea.vmem [#allocation2], %s2174
        // Predicated region
        $region65: #{vit_forward.1} parent=63 // pred_check
          %p2176 = pneg %p279
        $region66: #{vit_forward.1} parent=63 // pred_check_branch
          %2178 = sbr.rel (%p2176) target = $region68
        $region67: #{vit_forward.1} parent=63 // pred_region
          %s2180 = ssub.s32 16, 16
          %2181 = vsyncadd %s2173, %s2180
          %s2182 = smul.addr %s25, 16
          %s2183 = scalar_lea.hbm %s11, %s2182
          %s2185 = sshll.u32 %s2175, 4
          %s2186 = int_to_ptr.vmem [resolvable:$true] %s2185
          %2188 = dma.vmem_to_hbm [thread:$0]  %s2186, 16, %s2183, %s2173
        $region68: #{vit_forward.1} parent=63 // pred_fallthru
          _
      $region64: #{vit_forward.1} parent=5 // pred_fallthru
        _
      %p2189 = scmp.le.s32.totalorder 2, %s20
      // Predicated region
      $region69: #{vit_forward.1} parent=5 // pred_check
        %p2190 = pneg %p2189
      $region70: #{vit_forward.1} parent=5 // pred_check_branch
        %2192 = sbr.rel (%p2190) target = $region72
      $region71: #{vit_forward.1} parent=5 // pred_region
        %s2193 = ssub.s32 %s20, 2
        // Predicated region
        $region73: #{vit_forward.1} parent=71 // pred_check
          %p2194 = pneg %p285
        $region74: #{vit_forward.1} parent=71 // pred_check_branch
          %2196 = sbr.rel (%p2194) target = $region76
        $region75: #{vit_forward.1} parent=71 // pred_region
          %s2197 = sand.u32 %s270, 1
          %s2198 = scalar_lea.sflag [#allocation3], %s2197
          %s2199 = sand.u32 %s270, 1
          %s2200 = scalar_lea.vmem [#allocation2], %s2199
          %2201 = dma.done %s2198, 16
        $region76: #{vit_forward.1} parent=71 // pred_fallthru
          _
      $region72: #{vit_forward.1} parent=5 // pred_fallthru
        _
    $region6: #{vit_forward.1} parent=1 // loop_footer
      %s24 = sadd.s32 1, %s20
    $region7: #{vit_forward.1} parent=1 // loop_footer_branch
      %19 = sbr.rel target = $region3
    $region8: #{vit_forward.1} parent=1 // loop_exit
      _
    %2202 = vsyncpa [#allocation3], 1
    %s2203 = scalar_lea.sflag [#allocation3], 1
    %2204 = vsyncpa %s2203, 1

</llo_original>
